<compile_context>
chip_gen: v7x
topology: tpu7x:2x2x1
jax: 0.10.0
libtpu: 0.0.40
codegen_flags: <defaults>
</compile_context>

<pallas_src>
import jax
import jax.numpy as jnp
from jax.experimental import pallas as pl
from jax.experimental.pallas import tpu as pltpu

# --------------------------- small config ------------------------------------
BATCH = 2
IN_CH = 1            # ViT(in_channels=1, ...)
IMG = 32             # original module uses 224; small here
PATCH = 8            # args.vit_patch_size
HIDDEN = 128         # original 256
MLP_DIM = 256        # original 1024
NUM_HEADS = 4
NUM_LAYERS = 2       # args.vit_num_layers
HEAD_DIM = HIDDEN // NUM_HEADS
N_PATCH = (IMG // PATCH) ** 2          # 16
SEQ = N_PATCH + 1                      # 17 (cls + patches)
SEQ_PAD = 24                           # tokens padded to a multiple of 8
LN_EPS = 1e-5                          # nn.LayerNorm default
ATTN_SCALE = HEAD_DIM ** -0.5
PATCH_DIM = IN_CH * PATCH * PATCH      # 64
PATCH_PAD = 128                        # lane-dense patch operand

# fixed_vec rows
F_CLS, F_PATCH_B, F_LNF_G, F_LNF_B, F_HEAD_W, F_HEAD_B = 0, 1, 2, 3, 4, 5
# per-layer lvec rows
L_LN1_G, L_LN1_B, L_BO, L_LN2_G, L_LN2_B, L_BFC2 = 0, 1, 2, 3, 4, 5


# ----------------------------- kernel helpers --------------------------------
def _gelu(x):
    # TODO(synk): nn.GELU() defaults to exact erf GELU; tanh approximation used
    # because erf lowering is not guaranteed in Mosaic (~1e-3 rel. mismatch).
    c = jnp.float32(0.7978845608028654)  # sqrt(2/pi)
    return 0.5 * x * (1.0 + jnp.tanh(c * (x + 0.044715 * x * x * x)))


def _layernorm(x, g, b):
    mu = jnp.mean(x, axis=-1, keepdims=True)
    xc = x - mu
    var = jnp.mean(xc * xc, axis=-1, keepdims=True)   # biased var, like torch LN
    return xc * jax.lax.rsqrt(var + LN_EPS) * g + b


# ------------------------------ fused kernel ----------------------------------
def _encoder_kernel(
    patches_ref, patch_w_ref, pos_ref, fixed_ref,
    lvec_ref, w_qkv_ref, w_o_ref, w_fc1_ref, b_fc1_ref, w_fc2_ref,
    o_ref,
    x_sc,
):
    layer = pl.program_id(0)
    b = pl.program_id(1)

    # ---- front end (only at layer 0): patch matmul + pos-emb + cls + pad ----
    @pl.when(layer == 0)
    def _():
        p = patches_ref[0]                                           # (N_PATCH, 128) bf16
        emb = jnp.dot(p, patch_w_ref[...], preferred_element_type=jnp.float32)
        emb = emb + fixed_ref[F_PATCH_B:F_PATCH_B + 1, :] + pos_ref[...]
        x_sc[b] = jnp.concatenate(                                   # one unmasked slab store
            [fixed_ref[F_CLS:F_CLS + 1, :],                          # cls token
             emb,                                                    # 16 patch tokens
             jnp.zeros((SEQ_PAD - SEQ, HIDDEN), jnp.float32)],       # pad rows
            axis=0)

    x = x_sc[b]                                                      # (SEQ_PAD, HIDDEN) f32
    lv = lvec_ref[0]                                                 # (8, HIDDEN) f32

    # -------------------- self-attention branch --------------------
    h = _layernorm(x, lv[L_LN1_G:L_LN1_G + 1, :], lv[L_LN1_B:L_LN1_B + 1, :])
    qkv = jnp.dot(h.astype(jnp.bfloat16), w_qkv_ref[0],             # (24, 3*HIDDEN)
                  preferred_element_type=jnp.float32)
    key_ok = jax.lax.broadcasted_iota(jnp.int32, (SEQ_PAD, SEQ_PAD), 1) < SEQ
    head_outs = []
    for hd in range(NUM_HEADS):
        q = qkv[:, hd * HEAD_DIM:(hd + 1) * HEAD_DIM]
        k = qkv[:, HIDDEN + hd * HEAD_DIM:HIDDEN + (hd + 1) * HEAD_DIM]
        v = qkv[:, 2 * HIDDEN + hd * HEAD_DIM:2 * HIDDEN + (hd + 1) * HEAD_DIM]
        s = jax.lax.dot_general(q.astype(jnp.bfloat16), k.astype(jnp.bfloat16),
                                (((1,), (1,)), ((), ())),            # q @ k^T
                                preferred_element_type=jnp.float32) * ATTN_SCALE
        s = jnp.where(key_ok, s, jnp.float32(-1e30))                 # mask pad keys
        m = jnp.max(s, axis=-1, keepdims=True)
        p = jnp.exp(s - m)
        denom = jnp.sum(p, axis=-1, keepdims=True)
        p = p * pl.reciprocal(denom, approx=True)
        head_outs.append(jnp.dot(p.astype(jnp.bfloat16), v.astype(jnp.bfloat16),
                                 preferred_element_type=jnp.float32))
    attn = jnp.concatenate(head_outs, axis=-1)                       # (SEQ_PAD, HIDDEN)
    attn = jnp.dot(attn.astype(jnp.bfloat16), w_o_ref[0],            # fused out-proj
                   preferred_element_type=jnp.float32)
    x = x + attn + lv[L_BO:L_BO + 1, :]                               # residual

    # -------------------------- MLP branch --------------------------
    h2 = _layernorm(x, lv[L_LN2_G:L_LN2_G + 1, :], lv[L_LN2_B:L_LN2_B + 1, :])
    m1 = jnp.dot(h2.astype(jnp.bfloat16), w_fc1_ref[0],
                 preferred_element_type=jnp.float32) + b_fc1_ref[0]
    m1 = _gelu(m1)
    x = x + jnp.dot(m1.astype(jnp.bfloat16), w_fc2_ref[0],
                    preferred_element_type=jnp.float32) + lv[L_BFC2:L_BFC2 + 1, :]

    x_sc[b] = x                                                      # carry to next layer

    # ---- tail (only at the last layer): final LN + head + Tanh + Sigmoid ----
    @pl.when(layer == NUM_LAYERS - 1)
    def _():
        cls_vec = _layernorm(x[0:1, :],
                             fixed_ref[F_LNF_G:F_LNF_G + 1, :],
                             fixed_ref[F_LNF_B:F_LNF_B + 1, :])       # (1, H)
        logit = (jnp.sum(cls_vec * fixed_ref[F_HEAD_W:F_HEAD_W + 1, :],
                         axis=-1, keepdims=True)
                 + fixed_ref[F_HEAD_B:F_HEAD_B + 1, :])               # (1, 128), all lanes equal
        o_ref[0] = jax.nn.sigmoid(jnp.tanh(logit))                    # col 0 is the real value


# ----------------------------- parameters ------------------------------------
def init_params(key):
    def nrm(k, shape, scale=0.02):
        return (scale * jax.random.normal(k, shape)).astype(jnp.float32)

    keys = jax.random.split(key, 12)

    # global small vectors packed into one (8, HIDDEN) slab (1 DMA total).
    head_w_row = nrm(keys[0], (1, HIDDEN))                # Linear(hidden,1).weight as a row
    head_b = float(nrm(keys[1], (1, 1))[0, 0])
    fixed_vec = jnp.zeros((8, HIDDEN), jnp.float32)
    fixed_vec = fixed_vec.at[F_CLS].set(nrm(keys[2], (HIDDEN,)))       # cls token
    fixed_vec = fixed_vec.at[F_PATCH_B].set(nrm(keys[3], (HIDDEN,)))   # patch-embed bias
    fixed_vec = fixed_vec.at[F_LNF_G].set(1.0)                         # final LN gamma
    # F_LNF_B stays zero                                               # final LN beta
    fixed_vec = fixed_vec.at[F_HEAD_W].set(head_w_row[0])              # head weight
    fixed_vec = fixed_vec.at[F_HEAD_B].set(head_b)                     # head bias (bcast)

    # per-layer small vectors packed into one (NUM_LAYERS, 8, HIDDEN) slab.
    lvec = jnp.zeros((NUM_LAYERS, 8, HIDDEN), jnp.float32)
    lvec = lvec.at[:, L_LN1_G].set(1.0)                                # ln1 gamma
    lvec = lvec.at[:, L_BO].set(nrm(keys[4], (NUM_LAYERS, HIDDEN)))    # attn out-proj bias
    lvec = lvec.at[:, L_LN2_G].set(1.0)                                # ln2 gamma
    # ln1/ln2 beta and fc2 bias rows stay zero

    # patch embed: conv(k=p, stride=p) weight reshaped (c,i,j) -> rows, zero-padded to 128.
    patch_w = jnp.pad(nrm(keys[5], (PATCH_DIM, HIDDEN)),
                      ((0, PATCH_PAD - PATCH_DIM), (0, 0)))

    return {
        "patch_w": patch_w.astype(jnp.bfloat16),
        "pos_emb": nrm(keys[6], (N_PATCH, HIDDEN)),
        "fixed_vec": fixed_vec,
        "lvec": lvec,
        # fused QKV projection: [q | k | v] lane-concatenated (qkv_bias=False in MONAI ViT).
        "w_qkv": nrm(keys[7], (NUM_LAYERS, HIDDEN, 3 * HIDDEN)).astype(jnp.bfloat16),
        "w_o": nrm(keys[8], (NUM_LAYERS, HIDDEN, HIDDEN)).astype(jnp.bfloat16),
        "w_fc1": nrm(keys[9], (NUM_LAYERS, HIDDEN, MLP_DIM)).astype(jnp.bfloat16),
        "b_fc1": nrm(keys[10], (NUM_LAYERS, 1, MLP_DIM)),
        "w_fc2": nrm(keys[11], (NUM_LAYERS, MLP_DIM, HIDDEN)).astype(jnp.bfloat16),
    }


# ------------------------------- forward --------------------------------------
def vit_forward(x_img, params):
    B, C, H, W = x_img.shape
    hp, wp = H // PATCH, W // PATCH

    # One-time tiny XLA glue (8 KB input): Conv2d(k=p, stride=p) == patch
    # extraction in (c, i, j) order; zero-pad lanes 64->128 so the layer-0
    # matmul operand is lane-dense, and pre-cast to bf16.
    patches = x_img.reshape(B, C, hp, PATCH, wp, PATCH)
    patches = patches.transpose(0, 2, 4, 1, 3, 5).reshape(B, hp * wp, C * PATCH * PATCH)
    patches = jnp.pad(patches, ((0, 0), (0, 0), (0, PATCH_PAD - PATCH_DIM)))
    patches = patches.astype(jnp.bfloat16)

    def fixed(shape):        # shared by every grid step (fetched once)
        return pl.BlockSpec(shape, lambda l, b: (0,) * len(shape))

    def per_batch(shape):    # indexed by batch
        return pl.BlockSpec(shape, lambda l, b: (b,) + (0,) * (len(shape) - 1))

    def per_layer(shape):    # indexed by layer (layer is OUTER -> 1 DMA per layer)
        return pl.BlockSpec(shape, lambda l, b: (l,) + (0,) * (len(shape) - 1))

    in_specs = [
        per_batch((1, N_PATCH, PATCH_PAD)),             # patches (bf16)
        fixed((PATCH_PAD, HIDDEN)),                     # patch_w (bf16)
        fixed((N_PATCH, HIDDEN)),                       # pos_emb
        fixed((8, HIDDEN)),                             # fixed_vec (cls/bias/final-LN/head)
        per_layer((1, 8, HIDDEN)),                      # lvec (ln1/ln2/biases)
        per_layer((1, HIDDEN, 3 * HIDDEN)),             # w_qkv (bf16)
        per_layer((1, HIDDEN, HIDDEN)),                 # w_o   (bf16)
        per_layer((1, HIDDEN, MLP_DIM)),                # w_fc1 (bf16)
        per_layer((1, 1, MLP_DIM)),                     # b_fc1
        per_layer((1, MLP_DIM, HIDDEN)),                # w_fc2 (bf16)
    ]
    out_spec = pl.BlockSpec((1, 1, HIDDEN), lambda l, b: (b, 0, 0))

    out = pl.pallas_call(
        _encoder_kernel,
        out_shape=jax.ShapeDtypeStruct((B, 1, HIDDEN), jnp.float32),
        grid=(NUM_LAYERS, B),                           # layer outer, batch inner
        in_specs=in_specs,
        out_specs=out_spec,
        scratch_shapes=[pltpu.VMEM((B, SEQ_PAD, HIDDEN), jnp.float32)],  # per-batch activations
        compiler_params=pltpu.CompilerParams(
            dimension_semantics=("arbitrary", "parallel")),
    )(
        patches,
        params["patch_w"], params["pos_emb"], params["fixed_vec"],
        params["lvec"], params["w_qkv"], params["w_o"],
        params["w_fc1"], params["b_fc1"], params["w_fc2"],
    )
    return out[:, 0, :1]                                             # (B, 1)


if __name__ == "__main__":
    key = jax.random.PRNGKey(0)
    pkey, xkey = jax.random.split(key)
    params = init_params(pkey)
    x = jax.random.normal(xkey, (BATCH, IN_CH, IMG, IMG), dtype=jnp.float32)

    out = jax.jit(vit_forward)(x, params)
    out = jax.block_until_ready(out)

    assert out.shape == (BATCH, 1), out.shape
    assert bool(jnp.all(jnp.isfinite(out)))
    assert bool(jnp.all((out > 0.0) & (out < 1.0)))   # sigmoid(tanh(.)) range
    print("KERNEL_OK")
</pallas_src>

<mosaic_0001>
module attributes {stable_mosaic.version = 11 : i64} {
  func.func @_encoder_kernel(%arg0: i32, %arg1: i32, %arg2: memref<1x16x128xbf16, #tpu.memory_space<vmem>>, %arg3: memref<128x128xbf16, #tpu.memory_space<vmem>>, %arg4: memref<16x128xf32, #tpu.memory_space<vmem>>, %arg5: memref<8x128xf32, #tpu.memory_space<vmem>>, %arg6: memref<1x8x128xf32, #tpu.memory_space<vmem>>, %arg7: memref<1x128x384xbf16, #tpu.memory_space<vmem>>, %arg8: memref<1x128x128xbf16, #tpu.memory_space<vmem>>, %arg9: memref<1x128x256xbf16, #tpu.memory_space<vmem>>, %arg10: memref<1x1x256xf32, #tpu.memory_space<vmem>>, %arg11: memref<1x256x128xbf16, #tpu.memory_space<vmem>>, %arg12: memref<1x1x128xf32, #tpu.memory_space<vmem>>, %arg13: memref<2x24x128xf32, #tpu.memory_space<vmem>>) attributes {dimension_semantics = [#tpu.dimension_semantics<arbitrary>, #tpu.dimension_semantics<parallel>], iteration_bounds = array<i64: 2, 2>, scalar_prefetch = 0 : i64, scratch_operands = 1 : i64, tpu.core_type = #tpu.core_type<tc>, window_params = [{transform_indices = @transform_0, window_bounds = array<i64: 1, 16, 128>}, {pipeline_mode = #tpu.pipeline_mode<synchronous>, transform_indices = @transform_1, window_bounds = array<i64: 128, 128>}, {pipeline_mode = #tpu.pipeline_mode<synchronous>, transform_indices = @transform_2, window_bounds = array<i64: 16, 128>}, {pipeline_mode = #tpu.pipeline_mode<synchronous>, transform_indices = @transform_3, window_bounds = array<i64: 8, 128>}, {transform_indices = @transform_4, window_bounds = array<i64: 1, 8, 128>}, {transform_indices = @transform_5, window_bounds = array<i64: 1, 128, 384>}, {transform_indices = @transform_6, window_bounds = array<i64: 1, 128, 128>}, {transform_indices = @transform_7, window_bounds = array<i64: 1, 128, 256>}, {transform_indices = @transform_8, window_bounds = array<i64: 1, 1, 256>}, {transform_indices = @transform_9, window_bounds = array<i64: 1, 256, 128>}, {transform_indices = @transform_10, window_bounds = array<i64: 1, 1, 128>}]} {
    %c0_i32 = arith.constant 0 : i32
    %0 = arith.cmpi eq, %arg0, %c0_i32 : i32
    %1 = arith.extui %0 : i1 to i32
    %c0_i32_0 = arith.constant 0 : i32
    %2 = arith.cmpi ne, %1, %c0_i32_0 : i32
    scf.if %2 {
      %c0_64 = arith.constant 0 : index
      %c0_65 = arith.constant 0 : index
      %c0_66 = arith.constant 0 : index
      %196 = vector.load %arg2[%c0_64, %c0_65, %c0_66] : memref<1x16x128xbf16, #tpu.memory_space<vmem>>, vector<1x16x128xbf16>
      %197 = vector.shape_cast %196 : vector<1x16x128xbf16> to vector<16x128xbf16>
      %c0_67 = arith.constant 0 : index
      %c0_68 = arith.constant 0 : index
      %198 = vector.load %arg3[%c0_67, %c0_68] : memref<128x128xbf16, #tpu.memory_space<vmem>>, vector<128x128xbf16>
      %cst_69 = arith.constant dense<0.000000e+00> : vector<16x128xf32>
      %199 = tpu.matmul %197, %198, %cst_69 {dimension_numbers = #tpu.dot_dimension_numbers<[1], [0], [0], [1], [0, 0, 1, 1], [], []>} : vector<16x128xbf16>, vector<128x128xbf16>, vector<16x128xf32> -> vector<16x128xf32>
      %c1 = arith.constant 1 : index
      %c0_70 = arith.constant 0 : index
      %200 = vector.load %arg5[%c1, %c0_70] : memref<8x128xf32, #tpu.memory_space<vmem>>, vector<1x128xf32>
      %201 = vector.broadcast %200 : vector<1x128xf32> to vector<16x128xf32>
      %202 = arith.addf %199, %201 : vector<16x128xf32>
      %c0_71 = arith.constant 0 : index
      %c0_72 = arith.constant 0 : index
      %203 = vector.load %arg4[%c0_71, %c0_72] : memref<16x128xf32, #tpu.memory_space<vmem>>, vector<16x128xf32>
      %204 = arith.addf %202, %203 : vector<16x128xf32>
      %c0_73 = arith.constant 0 : index
      %c0_74 = arith.constant 0 : index
      %205 = vector.load %arg5[%c0_73, %c0_74] : memref<8x128xf32, #tpu.memory_space<vmem>>, vector<1x128xf32>
      %cst_75 = arith.constant 0.000000e+00 : f32
      %206 = vector.broadcast %cst_75 : f32 to vector<7x128xf32>
      %207 = tpu.concatenate %205, %204, %206 in 0 : vector<1x128xf32>, vector<16x128xf32>, vector<7x128xf32> -> vector<24x128xf32>
      %208 = arith.index_cast %arg1 : i32 to index
      %c0_76 = arith.constant 0 : index
      %c0_77 = arith.constant 0 : index
      %209 = vector.load %arg13[%208, %c0_76, %c0_77] : memref<2x24x128xf32, #tpu.memory_space<vmem>>, vector<1x24x128xf32>
      %210 = vector.shape_cast %209 : vector<1x24x128xf32> to vector<24x128xf32>
      %211 = vector.shape_cast %207 : vector<24x128xf32> to vector<1x24x128xf32>
      tpu.vector_store %arg13[%208, %c0_76, %c0_77], %211 {strides = array<i32>} : memref<2x24x128xf32, #tpu.memory_space<vmem>>, vector<1x24x128xf32>,
    } else {
    }
    %3 = arith.index_cast %arg1 : i32 to index
    %c0 = arith.constant 0 : index
    %c0_1 = arith.constant 0 : index
    %4 = vector.load %arg13[%3, %c0, %c0_1] : memref<2x24x128xf32, #tpu.memory_space<vmem>>, vector<1x24x128xf32>
    %5 = vector.shape_cast %4 : vector<1x24x128xf32> to vector<24x128xf32>
    %c0_2 = arith.constant 0 : index
    %c0_3 = arith.constant 0 : index
    %c0_4 = arith.constant 0 : index
    %6 = vector.load %arg6[%c0_2, %c0_3, %c0_4] : memref<1x8x128xf32, #tpu.memory_space<vmem>>, vector<1x8x128xf32>
    %7 = vector.shape_cast %6 : vector<1x8x128xf32> to vector<8x128xf32>
    %8 = vector.extract_strided_slice %7 {offsets = [0, 0], sizes = [1, 128], strides = [1, 1]} : vector<8x128xf32> to vector<1x128xf32>
    %9 = vector.extract_strided_slice %7 {offsets = [1, 0], sizes = [1, 128], strides = [1, 1]} : vector<8x128xf32> to vector<1x128xf32>
    %cst = arith.constant dense<0.000000e+00> : vector<24xf32>
    %10 = vector.multi_reduction <add>, %5, %cst [1] : vector<24x128xf32> to vector<24xf32>
    %11 = vector.shape_cast %10 : vector<24xf32> to vector<24x1xf32>
    %cst_5 = arith.constant 1.280000e+02 : f32
    %12 = vector.broadcast %cst_5 : f32 to vector<24x1xf32>
    %13 = arith.divf %11, %12 : vector<24x1xf32>
    %14 = vector.broadcast %13 : vector<24x1xf32> to vector<24x128xf32>
    %15 = arith.subf %5, %14 : vector<24x128xf32>
    %16 = arith.mulf %15, %15 : vector<24x128xf32>
    %cst_6 = arith.constant dense<0.000000e+00> : vector<24xf32>
    %17 = vector.multi_reduction <add>, %16, %cst_6 [1] : vector<24x128xf32> to vector<24xf32>
    %18 = vector.shape_cast %17 : vector<24xf32> to vector<24x1xf32>
    %cst_7 = arith.constant 1.280000e+02 : f32
    %19 = vector.broadcast %cst_7 : f32 to vector<24x1xf32>
    %20 = arith.divf %18, %19 : vector<24x1xf32>
    %cst_8 = arith.constant 9.99999974E-6 : f32
    %21 = vector.broadcast %cst_8 : f32 to vector<24x1xf32>
    %22 = arith.addf %20, %21 : vector<24x1xf32>
    %23 = math.rsqrt %22 : vector<24x1xf32>
    %24 = vector.broadcast %23 : vector<24x1xf32> to vector<24x128xf32>
    %25 = arith.mulf %15, %24 : vector<24x128xf32>
    %26 = vector.broadcast %8 : vector<1x128xf32> to vector<24x128xf32>
    %27 = arith.mulf %25, %26 : vector<24x128xf32>
    %28 = vector.broadcast %9 : vector<1x128xf32> to vector<24x128xf32>
    %29 = arith.addf %27, %28 : vector<24x128xf32>
    %30 = arith.truncf %29 : vector<24x128xf32> to vector<24x128xbf16>
    %c0_9 = arith.constant 0 : index
    %c0_10 = arith.constant 0 : index
    %c0_11 = arith.constant 0 : index
    %31 = vector.load %arg7[%c0_9, %c0_10, %c0_11] : memref<1x128x384xbf16, #tpu.memory_space<vmem>>, vector<1x128x384xbf16>
    %32 = vector.shape_cast %31 : vector<1x128x384xbf16> to vector<128x384xbf16>
    %cst_12 = arith.constant dense<0.000000e+00> : vector<24x384xf32>
    %33 = tpu.matmul %30, %32, %cst_12 {dimension_numbers = #tpu.dot_dimension_numbers<[1], [0], [0], [1], [0, 0, 1, 1], [], []>} : vector<24x128xbf16>, vector<128x384xbf16>, vector<24x384xf32> -> vector<24x384xf32>
    %34 = tpu.iota {dimensions = array<i32: 1>} : vector<24x24xi32>
    %c17_i32 = arith.constant 17 : i32
    %35 = vector.broadcast %c17_i32 : i32 to vector<24x24xi32>
    %36 = arith.cmpi slt, %34, %35 : vector<24x24xi32>
    %37 = vector.extract_strided_slice %33 {offsets = [0, 0], sizes = [24, 32], strides = [1, 1]} : vector<24x384xf32> to vector<24x32xf32>
    %38 = vector.extract_strided_slice %33 {offsets = [0, 128], sizes = [24, 32], strides = [1, 1]} : vector<24x384xf32> to vector<24x32xf32>
    %39 = vector.extract_strided_slice %33 {offsets = [0, 256], sizes = [24, 32], strides = [1, 1]} : vector<24x384xf32> to vector<24x32xf32>
    %40 = arith.truncf %37 : vector<24x32xf32> to vector<24x32xbf16>
    %41 = arith.truncf %38 : vector<24x32xf32> to vector<24x32xbf16>
    %cst_13 = arith.constant dense<0.000000e+00> : vector<24x24xf32>
    %42 = tpu.matmul %40, %41, %cst_13 {dimension_numbers = #tpu.dot_dimension_numbers<[1], [1], [0], [0], [0, 0, 1, 0], [], []>} : vector<24x32xbf16>, vector<24x32xbf16>, vector<24x24xf32> -> vector<24x24xf32>
    %cst_14 = arith.constant 0.176776692 : f32
    %43 = vector.broadcast %cst_14 : f32 to vector<24x24xf32>
    %44 = arith.mulf %42, %43 : vector<24x24xf32>
    %cst_15 = arith.constant -1.000000e+30 : f32
    %45 = vector.broadcast %cst_15 : f32 to vector<24x24xf32>
    %46 = arith.select %36, %44, %45 : vector<24x24xi1>, vector<24x24xf32>
    %cst_16 = arith.constant dense<0xFF800000> : vector<24xf32>
    %47 = vector.multi_reduction <maximumf>, %46, %cst_16 [1] : vector<24x24xf32> to vector<24xf32>
    %48 = vector.shape_cast %47 : vector<24xf32> to vector<24x1xf32>
    %49 = vector.broadcast %48 : vector<24x1xf32> to vector<24x24xf32>
    %50 = arith.subf %46, %49 : vector<24x24xf32>
    %51 = math.exp %50 : vector<24x24xf32>
    %cst_17 = arith.constant dense<0.000000e+00> : vector<24xf32>
    %52 = vector.multi_reduction <add>, %51, %cst_17 [1] : vector<24x24xf32> to vector<24xf32>
    %53 = vector.shape_cast %52 : vector<24xf32> to vector<24x1xf32>
    %54 = tpu.reciprocal %53 {approx = true} : vector<24x1xf32> -> vector<24x1xf32>
    %55 = vector.broadcast %54 : vector<24x1xf32> to vector<24x24xf32>
    %56 = arith.mulf %51, %55 : vector<24x24xf32>
    %57 = arith.truncf %56 : vector<24x24xf32> to vector<24x24xbf16>
    %58 = arith.truncf %39 : vector<24x32xf32> to vector<24x32xbf16>
    %cst_18 = arith.constant dense<0.000000e+00> : vector<24x32xf32>
    %59 = tpu.matmul %57, %58, %cst_18 {dimension_numbers = #tpu.dot_dimension_numbers<[1], [0], [0], [1], [0, 0, 1, 1], [], []>} : vector<24x24xbf16>, vector<24x32xbf16>, vector<24x32xf32> -> vector<24x32xf32>
    %60 = vector.extract_strided_slice %33 {offsets = [0, 32], sizes = [24, 32], strides = [1, 1]} : vector<24x384xf32> to vector<24x32xf32>
    %61 = vector.extract_strided_slice %33 {offsets = [0, 160], sizes = [24, 32], strides = [1, 1]} : vector<24x384xf32> to vector<24x32xf32>
    %62 = vector.extract_strided_slice %33 {offsets = [0, 288], sizes = [24, 32], strides = [1, 1]} : vector<24x384xf32> to vector<24x32xf32>
    %63 = arith.truncf %60 : vector<24x32xf32> to vector<24x32xbf16>
    %64 = arith.truncf %61 : vector<24x32xf32> to vector<24x32xbf16>
    %cst_19 = arith.constant dense<0.000000e+00> : vector<24x24xf32>
    %65 = tpu.matmul %63, %64, %cst_19 {dimension_numbers = #tpu.dot_dimension_numbers<[1], [1], [0], [0], [0, 0, 1, 0], [], []>} : vector<24x32xbf16>, vector<24x32xbf16>, vector<24x24xf32> -> vector<24x24xf32>
    %cst_20 = arith.constant 0.176776692 : f32
    %66 = vector.broadcast %cst_20 : f32 to vector<24x24xf32>
    %67 = arith.mulf %65, %66 : vector<24x24xf32>
    %cst_21 = arith.constant -1.000000e+30 : f32
    %68 = vector.broadcast %cst_21 : f32 to vector<24x24xf32>
    %69 = arith.select %36, %67, %68 : vector<24x24xi1>, vector<24x24xf32>
    %cst_22 = arith.constant dense<0xFF800000> : vector<24xf32>
    %70 = vector.multi_reduction <maximumf>, %69, %cst_22 [1] : vector<24x24xf32> to vector<24xf32>
    %71 = vector.shape_cast %70 : vector<24xf32> to vector<24x1xf32>
    %72 = vector.broadcast %71 : vector<24x1xf32> to vector<24x24xf32>
    %73 = arith.subf %69, %72 : vector<24x24xf32>
    %74 = math.exp %73 : vector<24x24xf32>
    %cst_23 = arith.constant dense<0.000000e+00> : vector<24xf32>
    %75 = vector.multi_reduction <add>, %74, %cst_23 [1] : vector<24x24xf32> to vector<24xf32>
    %76 = vector.shape_cast %75 : vector<24xf32> to vector<24x1xf32>
    %77 = tpu.reciprocal %76 {approx = true} : vector<24x1xf32> -> vector<24x1xf32>
    %78 = vector.broadcast %77 : vector<24x1xf32> to vector<24x24xf32>
    %79 = arith.mulf %74, %78 : vector<24x24xf32>
    %80 = arith.truncf %79 : vector<24x24xf32> to vector<24x24xbf16>
    %81 = arith.truncf %62 : vector<24x32xf32> to vector<24x32xbf16>
    %cst_24 = arith.constant dense<0.000000e+00> : vector<24x32xf32>
    %82 = tpu.matmul %80, %81, %cst_24 {dimension_numbers = #tpu.dot_dimension_numbers<[1], [0], [0], [1], [0, 0, 1, 1], [], []>} : vector<24x24xbf16>, vector<24x32xbf16>, vector<24x32xf32> -> vector<24x32xf32>
    %83 = vector.extract_strided_slice %33 {offsets = [0, 64], sizes = [24, 32], strides = [1, 1]} : vector<24x384xf32> to vector<24x32xf32>
    %84 = vector.extract_strided_slice %33 {offsets = [0, 192], sizes = [24, 32], strides = [1, 1]} : vector<24x384xf32> to vector<24x32xf32>
    %85 = vector.extract_strided_slice %33 {offsets = [0, 320], sizes = [24, 32], strides = [1, 1]} : vector<24x384xf32> to vector<24x32xf32>
    %86 = arith.truncf %83 : vector<24x32xf32> to vector<24x32xbf16>
    %87 = arith.truncf %84 : vector<24x32xf32> to vector<24x32xbf16>
    %cst_25 = arith.constant dense<0.000000e+00> : vector<24x24xf32>
    %88 = tpu.matmul %86, %87, %cst_25 {dimension_numbers = #tpu.dot_dimension_numbers<[1], [1], [0], [0], [0, 0, 1, 0], [], []>} : vector<24x32xbf16>, vector<24x32xbf16>, vector<24x24xf32> -> vector<24x24xf32>
    %cst_26 = arith.constant 0.176776692 : f32
    %89 = vector.broadcast %cst_26 : f32 to vector<24x24xf32>
    %90 = arith.mulf %88, %89 : vector<24x24xf32>
    %cst_27 = arith.constant -1.000000e+30 : f32
    %91 = vector.broadcast %cst_27 : f32 to vector<24x24xf32>
    %92 = arith.select %36, %90, %91 : vector<24x24xi1>, vector<24x24xf32>
    %cst_28 = arith.constant dense<0xFF800000> : vector<24xf32>
    %93 = vector.multi_reduction <maximumf>, %92, %cst_28 [1] : vector<24x24xf32> to vector<24xf32>
    %94 = vector.shape_cast %93 : vector<24xf32> to vector<24x1xf32>
    %95 = vector.broadcast %94 : vector<24x1xf32> to vector<24x24xf32>
    %96 = arith.subf %92, %95 : vector<24x24xf32>
    %97 = math.exp %96 : vector<24x24xf32>
    %cst_29 = arith.constant dense<0.000000e+00> : vector<24xf32>
    %98 = vector.multi_reduction <add>, %97, %cst_29 [1] : vector<24x24xf32> to vector<24xf32>
    %99 = vector.shape_cast %98 : vector<24xf32> to vector<24x1xf32>
    %100 = tpu.reciprocal %99 {approx = true} : vector<24x1xf32> -> vector<24x1xf32>
    %101 = vector.broadcast %100 : vector<24x1xf32> to vector<24x24xf32>
    %102 = arith.mulf %97, %101 : vector<24x24xf32>
    %103 = arith.truncf %102 : vector<24x24xf32> to vector<24x24xbf16>
    %104 = arith.truncf %85 : vector<24x32xf32> to vector<24x32xbf16>
    %cst_30 = arith.constant dense<0.000000e+00> : vector<24x32xf32>
    %105 = tpu.matmul %103, %104, %cst_30 {dimension_numbers = #tpu.dot_dimension_numbers<[1], [0], [0], [1], [0, 0, 1, 1], [], []>} : vector<24x24xbf16>, vector<24x32xbf16>, vector<24x32xf32> -> vector<24x32xf32>
    %106 = vector.extract_strided_slice %33 {offsets = [0, 96], sizes = [24, 32], strides = [1, 1]} : vector<24x384xf32> to vector<24x32xf32>
    %107 = vector.extract_strided_slice %33 {offsets = [0, 224], sizes = [24, 32], strides = [1, 1]} : vector<24x384xf32> to vector<24x32xf32>
    %108 = vector.extract_strided_slice %33 {offsets = [0, 352], sizes = [24, 32], strides = [1, 1]} : vector<24x384xf32> to vector<24x32xf32>
    %109 = arith.truncf %106 : vector<24x32xf32> to vector<24x32xbf16>
    %110 = arith.truncf %107 : vector<24x32xf32> to vector<24x32xbf16>
    %cst_31 = arith.constant dense<0.000000e+00> : vector<24x24xf32>
    %111 = tpu.matmul %109, %110, %cst_31 {dimension_numbers = #tpu.dot_dimension_numbers<[1], [1], [0], [0], [0, 0, 1, 0], [], []>} : vector<24x32xbf16>, vector<24x32xbf16>, vector<24x24xf32> -> vector<24x24xf32>
    %cst_32 = arith.constant 0.176776692 : f32
    %112 = vector.broadcast %cst_32 : f32 to vector<24x24xf32>
    %113 = arith.mulf %111, %112 : vector<24x24xf32>
    %cst_33 = arith.constant -1.000000e+30 : f32
    %114 = vector.broadcast %cst_33 : f32 to vector<24x24xf32>
    %115 = arith.select %36, %113, %114 : vector<24x24xi1>, vector<24x24xf32>
    %cst_34 = arith.constant dense<0xFF800000> : vector<24xf32>
    %116 = vector.multi_reduction <maximumf>, %115, %cst_34 [1] : vector<24x24xf32> to vector<24xf32>
    %117 = vector.shape_cast %116 : vector<24xf32> to vector<24x1xf32>
    %118 = vector.broadcast %117 : vector<24x1xf32> to vector<24x24xf32>
    %119 = arith.subf %115, %118 : vector<24x24xf32>
    %120 = math.exp %119 : vector<24x24xf32>
    %cst_35 = arith.constant dense<0.000000e+00> : vector<24xf32>
    %121 = vector.multi_reduction <add>, %120, %cst_35 [1] : vector<24x24xf32> to vector<24xf32>
    %122 = vector.shape_cast %121 : vector<24xf32> to vector<24x1xf32>
    %123 = tpu.reciprocal %122 {approx = true} : vector<24x1xf32> -> vector<24x1xf32>
    %124 = vector.broadcast %123 : vector<24x1xf32> to vector<24x24xf32>
    %125 = arith.mulf %120, %124 : vector<24x24xf32>
    %126 = arith.truncf %125 : vector<24x24xf32> to vector<24x24xbf16>
    %127 = arith.truncf %108 : vector<24x32xf32> to vector<24x32xbf16>
    %cst_36 = arith.constant dense<0.000000e+00> : vector<24x32xf32>
    %128 = tpu.matmul %126, %127, %cst_36 {dimension_numbers = #tpu.dot_dimension_numbers<[1], [0], [0], [1], [0, 0, 1, 1], [], []>} : vector<24x24xbf16>, vector<24x32xbf16>, vector<24x32xf32> -> vector<24x32xf32>
    %129 = tpu.concatenate %59, %82, %105, %128 in 1 : vector<24x32xf32>, vector<24x32xf32>, vector<24x32xf32>, vector<24x32xf32> -> vector<24x128xf32>
    %130 = arith.truncf %129 : vector<24x128xf32> to vector<24x128xbf16>
    %c0_37 = arith.constant 0 : index
    %c0_38 = arith.constant 0 : index
    %c0_39 = arith.constant 0 : index
    %131 = vector.load %arg8[%c0_37, %c0_38, %c0_39] : memref<1x128x128xbf16, #tpu.memory_space<vmem>>, vector<1x128x128xbf16>
    %132 = vector.shape_cast %131 : vector<1x128x128xbf16> to vector<128x128xbf16>
    %cst_40 = arith.constant dense<0.000000e+00> : vector<24x128xf32>
    %133 = tpu.matmul %130, %132, %cst_40 {dimension_numbers = #tpu.dot_dimension_numbers<[1], [0], [0], [1], [0, 0, 1, 1], [], []>} : vector<24x128xbf16>, vector<128x128xbf16>, vector<24x128xf32> -> vector<24x128xf32>
    %134 = arith.addf %5, %133 : vector<24x128xf32>
    %135 = vector.extract_strided_slice %7 {offsets = [2, 0], sizes = [1, 128], strides = [1, 1]} : vector<8x128xf32> to vector<1x128xf32>
    %136 = vector.broadcast %135 : vector<1x128xf32> to vector<24x128xf32>
    %137 = arith.addf %134, %136 : vector<24x128xf32>
    %138 = vector.extract_strided_slice %7 {offsets = [3, 0], sizes = [1, 128], strides = [1, 1]} : vector<8x128xf32> to vector<1x128xf32>
    %139 = vector.extract_strided_slice %7 {offsets = [4, 0], sizes = [1, 128], strides = [1, 1]} : vector<8x128xf32> to vector<1x128xf32>
    %cst_41 = arith.constant dense<0.000000e+00> : vector<24xf32>
    %140 = vector.multi_reduction <add>, %137, %cst_41 [1] : vector<24x128xf32> to vector<24xf32>
    %141 = vector.shape_cast %140 : vector<24xf32> to vector<24x1xf32>
    %cst_42 = arith.constant 1.280000e+02 : f32
    %142 = vector.broadcast %cst_42 : f32 to vector<24x1xf32>
    %143 = arith.divf %141, %142 : vector<24x1xf32>
    %144 = vector.broadcast %143 : vector<24x1xf32> to vector<24x128xf32>
    %145 = arith.subf %137, %144 : vector<24x128xf32>
    %146 = arith.mulf %145, %145 : vector<24x128xf32>
    %cst_43 = arith.constant dense<0.000000e+00> : vector<24xf32>
    %147 = vector.multi_reduction <add>, %146, %cst_43 [1] : vector<24x128xf32> to vector<24xf32>
    %148 = vector.shape_cast %147 : vector<24xf32> to vector<24x1xf32>
    %cst_44 = arith.constant 1.280000e+02 : f32
    %149 = vector.broadcast %cst_44 : f32 to vector<24x1xf32>
    %150 = arith.divf %148, %149 : vector<24x1xf32>
    %cst_45 = arith.constant 9.99999974E-6 : f32
    %151 = vector.broadcast %cst_45 : f32 to vector<24x1xf32>
    %152 = arith.addf %150, %151 : vector<24x1xf32>
    %153 = math.rsqrt %152 : vector<24x1xf32>
    %154 = vector.broadcast %153 : vector<24x1xf32> to vector<24x128xf32>
    %155 = arith.mulf %145, %154 : vector<24x128xf32>
    %156 = vector.broadcast %138 : vector<1x128xf32> to vector<24x128xf32>
    %157 = arith.mulf %155, %156 : vector<24x128xf32>
    %158 = vector.broadcast %139 : vector<1x128xf32> to vector<24x128xf32>
    %159 = arith.addf %157, %158 : vector<24x128xf32>
    %160 = arith.truncf %159 : vector<24x128xf32> to vector<24x128xbf16>
    %c0_46 = arith.constant 0 : index
    %c0_47 = arith.constant 0 : index
    %c0_48 = arith.constant 0 : index
    %161 = vector.load %arg9[%c0_46, %c0_47, %c0_48] : memref<1x128x256xbf16, #tpu.memory_space<vmem>>, vector<1x128x256xbf16>
    %162 = vector.shape_cast %161 : vector<1x128x256xbf16> to vector<128x256xbf16>
    %cst_49 = arith.constant dense<0.000000e+00> : vector<24x256xf32>
    %163 = tpu.matmul %160, %162, %cst_49 {dimension_numbers = #tpu.dot_dimension_numbers<[1], [0], [0], [1], [0, 0, 1, 1], [], []>} : vector<24x128xbf16>, vector<128x256xbf16>, vector<24x256xf32> -> vector<24x256xf32>
    %c0_50 = arith.constant 0 : index
    %c0_51 = arith.constant 0 : index
    %c0_52 = arith.constant 0 : index
    %164 = vector.load %arg10[%c0_50, %c0_51, %c0_52] : memref<1x1x256xf32, #tpu.memory_space<vmem>>, vector<1x1x256xf32>
    %165 = vector.shape_cast %164 : vector<1x1x256xf32> to vector<1x256xf32>
    %166 = vector.broadcast %165 : vector<1x256xf32> to vector<24x256xf32>
    %167 = arith.addf %163, %166 : vector<24x256xf32>
    %cst_53 = arith.constant 5.000000e-01 : f32
    %168 = vector.broadcast %cst_53 : f32 to vector<24x256xf32>
    %169 = arith.mulf %168, %167 : vector<24x256xf32>
    %cst_54 = arith.constant 4.471500e-02 : f32
    %170 = vector.broadcast %cst_54 : f32 to vector<24x256xf32>
    %171 = arith.mulf %170, %167 : vector<24x256xf32>
    %172 = arith.mulf %171, %167 : vector<24x256xf32>
    %173 = arith.mulf %172, %167 : vector<24x256xf32>
    %174 = arith.addf %167, %173 : vector<24x256xf32>
    %cst_55 = arith.constant 0.797884583 : f32
    %175 = vector.broadcast %cst_55 : f32 to vector<24x256xf32>
    %176 = arith.mulf %175, %174 : vector<24x256xf32>
    %177 = math.tanh %176 : vector<24x256xf32>
    %cst_56 = arith.constant 1.000000e+00 : f32
    %178 = vector.broadcast %cst_56 : f32 to vector<24x256xf32>
    %179 = arith.addf %178, %177 : vector<24x256xf32>
    %180 = arith.mulf %169, %179 : vector<24x256xf32>
    %181 = arith.truncf %180 : vector<24x256xf32> to vector<24x256xbf16>
    %c0_57 = arith.constant 0 : index
    %c0_58 = arith.constant 0 : index
    %c0_59 = arith.constant 0 : index
    %182 = vector.load %arg11[%c0_57, %c0_58, %c0_59] : memref<1x256x128xbf16, #tpu.memory_space<vmem>>, vector<1x256x128xbf16>
    %183 = vector.shape_cast %182 : vector<1x256x128xbf16> to vector<256x128xbf16>
    %cst_60 = arith.constant dense<0.000000e+00> : vector<24x128xf32>
    %184 = tpu.matmul %181, %183, %cst_60 {dimension_numbers = #tpu.dot_dimension_numbers<[1], [0], [0], [1], [0, 0, 1, 1], [], []>} : vector<24x256xbf16>, vector<256x128xbf16>, vector<24x128xf32> -> vector<24x128xf32>
    %185 = arith.addf %137, %184 : vector<24x128xf32>
    %186 = vector.extract_strided_slice %7 {offsets = [5, 0], sizes = [1, 128], strides = [1, 1]} : vector<8x128xf32> to vector<1x128xf32>
    %187 = vector.broadcast %186 : vector<1x128xf32> to vector<24x128xf32>
    %188 = arith.addf %185, %187 : vector<24x128xf32>
    %189 = arith.index_cast %arg1 : i32 to index
    %c0_61 = arith.constant 0 : index
    %c0_62 = arith.constant 0 : index
    %190 = vector.load %arg13[%189, %c0_61, %c0_62] : memref<2x24x128xf32, #tpu.memory_space<vmem>>, vector<1x24x128xf32>
    %191 = vector.shape_cast %190 : vector<1x24x128xf32> to vector<24x128xf32>
    %192 = vector.shape_cast %188 : vector<24x128xf32> to vector<1x24x128xf32>
    tpu.vector_store %arg13[%189, %c0_61, %c0_62], %192 {strides = array<i32>} : memref<2x24x128xf32, #tpu.memory_space<vmem>>, vector<1x24x128xf32>,
    %c1_i32 = arith.constant 1 : i32
    %193 = arith.cmpi eq, %arg0, %c1_i32 : i32
    %194 = arith.extui %193 : i1 to i32
    %c0_i32_63 = arith.constant 0 : i32
    %195 = arith.cmpi ne, %194, %c0_i32_63 : i32
    scf.if %195 {
      %196 = vector.extract_strided_slice %188 {offsets = [0, 0], sizes = [1, 128], strides = [1, 1]} : vector<24x128xf32> to vector<1x128xf32>
      %c2 = arith.constant 2 : index
      %c0_64 = arith.constant 0 : index
      %197 = vector.load %arg5[%c2, %c0_64] : memref<8x128xf32, #tpu.memory_space<vmem>>, vector<1x128xf32>
      %c3 = arith.constant 3 : index
      %c0_65 = arith.constant 0 : index
      %198 = vector.load %arg5[%c3, %c0_65] : memref<8x128xf32, #tpu.memory_space<vmem>>, vector<1x128xf32>
      %cst_66 = arith.constant dense<0.000000e+00> : vector<1xf32>
      %199 = vector.multi_reduction <add>, %196, %cst_66 [1] : vector<1x128xf32> to vector<1xf32>
      %200 = vector.shape_cast %199 : vector<1xf32> to vector<1x1xf32>
      %cst_67 = arith.constant 1.280000e+02 : f32
      %201 = vector.broadcast %cst_67 : f32 to vector<1x1xf32>
      %202 = arith.divf %200, %201 : vector<1x1xf32>
      %203 = vector.broadcast %202 : vector<1x1xf32> to vector<1x128xf32>
      %204 = arith.subf %196, %203 : vector<1x128xf32>
      %205 = arith.mulf %204, %204 : vector<1x128xf32>
      %cst_68 = arith.constant dense<0.000000e+00> : vector<1xf32>
      %206 = vector.multi_reduction <add>, %205, %cst_68 [1] : vector<1x128xf32> to vector<1xf32>
      %207 = vector.shape_cast %206 : vector<1xf32> to vector<1x1xf32>
      %cst_69 = arith.constant 1.280000e+02 : f32
      %208 = vector.broadcast %cst_69 : f32 to vector<1x1xf32>
      %209 = arith.divf %207, %208 : vector<1x1xf32>
      %cst_70 = arith.constant 9.99999974E-6 : f32
      %210 = vector.broadcast %cst_70 : f32 to vector<1x1xf32>
      %211 = arith.addf %209, %210 : vector<1x1xf32>
      %212 = math.rsqrt %211 : vector<1x1xf32>
      %213 = vector.broadcast %212 : vector<1x1xf32> to vector<1x128xf32>
      %214 = arith.mulf %204, %213 : vector<1x128xf32>
      %215 = arith.mulf %214, %197 : vector<1x128xf32>
      %216 = arith.addf %215, %198 : vector<1x128xf32>
      %c4 = arith.constant 4 : index
      %c0_71 = arith.constant 0 : index
      %217 = vector.load %arg5[%c4, %c0_71] : memref<8x128xf32, #tpu.memory_space<vmem>>, vector<1x128xf32>
      %218 = arith.mulf %216, %217 : vector<1x128xf32>
      %cst_72 = arith.constant dense<0.000000e+00> : vector<1xf32>
      %219 = vector.multi_reduction <add>, %218, %cst_72 [1] : vector<1x128xf32> to vector<1xf32>
      %220 = vector.shape_cast %219 : vector<1xf32> to vector<1x1xf32>
      %c5 = arith.constant 5 : index
      %c0_73 = arith.constant 0 : index
      %221 = vector.load %arg5[%c5, %c0_73] : memref<8x128xf32, #tpu.memory_space<vmem>>, vector<1x128xf32>
      %222 = vector.broadcast %220 : vector<1x1xf32> to vector<1x128xf32>
      %223 = arith.addf %222, %221 : vector<1x128xf32>
      %224 = math.tanh %223 : vector<1x128xf32>
      %225 = arith.negf %224 : vector<1x128xf32>
      %226 = math.exp %225 : vector<1x128xf32>
      %cst_74 = arith.constant 1.000000e+00 : f32
      %227 = vector.broadcast %cst_74 : f32 to vector<1x128xf32>
      %228 = arith.addf %227, %226 : vector<1x128xf32>
      %229 = arith.divf %227, %228 : vector<1x128xf32>
      %c0_75 = arith.constant 0 : index
      %c0_76 = arith.constant 0 : index
      %c0_77 = arith.constant 0 : index
      %230 = vector.load %arg12[%c0_75, %c0_76, %c0_77] : memref<1x1x128xf32, #tpu.memory_space<vmem>>, vector<1x1x128xf32>
      %231 = vector.shape_cast %230 : vector<1x1x128xf32> to vector<1x128xf32>
      %232 = vector.shape_cast %229 : vector<1x128xf32> to vector<1x1x128xf32>
      tpu.vector_store %arg12[%c0_75, %c0_76, %c0_77], %232 {strides = array<i32>} : memref<1x1x128xf32, #tpu.memory_space<vmem>>, vector<1x1x128xf32>,
    } else {
    }
    return
  }
  func.func @transform_0(%arg0: i32, %arg1: i32) -> (i32, i32, i32) {
    %c0_i32 = arith.constant 0 : i32
    %c0_i32_0 = arith.constant 0 : i32
    %c0_i32_1 = arith.constant 0 : i32
    return %arg1, %c0_i32, %c0_i32_0 : i32, i32, i32
  }
  func.func @transform_1(%arg0: i32, %arg1: i32) -> (i32, i32) {
    %c0_i32 = arith.constant 0 : i32
    %c0_i32_0 = arith.constant 0 : i32
    %c0_i32_1 = arith.constant 0 : i32
    return %c0_i32, %c0_i32_0 : i32, i32
  }
  func.func @transform_2(%arg0: i32, %arg1: i32) -> (i32, i32) {
    %c0_i32 = arith.constant 0 : i32
    %c0_i32_0 = arith.constant 0 : i32
    %c0_i32_1 = arith.constant 0 : i32
    return %c0_i32, %c0_i32_0 : i32, i32
  }
  func.func @transform_3(%arg0: i32, %arg1: i32) -> (i32, i32) {
    %c0_i32 = arith.constant 0 : i32
    %c0_i32_0 = arith.constant 0 : i32
    %c0_i32_1 = arith.constant 0 : i32
    return %c0_i32, %c0_i32_0 : i32, i32
  }
  func.func @transform_4(%arg0: i32, %arg1: i32) -> (i32, i32, i32) {
    %c0_i32 = arith.constant 0 : i32
    %c0_i32_0 = arith.constant 0 : i32
    %c0_i32_1 = arith.constant 0 : i32
    return %arg0, %c0_i32, %c0_i32_0 : i32, i32, i32
  }
  func.func @transform_5(%arg0: i32, %arg1: i32) -> (i32, i32, i32) {
    %c0_i32 = arith.constant 0 : i32
    %c0_i32_0 = arith.constant 0 : i32
    %c0_i32_1 = arith.constant 0 : i32
    return %arg0, %c0_i32, %c0_i32_0 : i32, i32, i32
  }
  func.func @transform_6(%arg0: i32, %arg1: i32) -> (i32, i32, i32) {
    %c0_i32 = arith.constant 0 : i32
    %c0_i32_0 = arith.constant 0 : i32
    %c0_i32_1 = arith.constant 0 : i32
    return %arg0, %c0_i32, %c0_i32_0 : i32, i32, i32
  }
  func.func @transform_7(%arg0: i32, %arg1: i32) -> (i32, i32, i32) {
    %c0_i32 = arith.constant 0 : i32
    %c0_i32_0 = arith.constant 0 : i32
    %c0_i32_1 = arith.constant 0 : i32
    return %arg0, %c0_i32, %c0_i32_0 : i32, i32, i32
  }
  func.func @transform_8(%arg0: i32, %arg1: i32) -> (i32, i32, i32) {
    %c0_i32 = arith.constant 0 : i32
    %c0_i32_0 = arith.constant 0 : i32
    %c0_i32_1 = arith.constant 0 : i32
    return %arg0, %c0_i32, %c0_i32_0 : i32, i32, i32
  }
  func.func @transform_9(%arg0: i32, %arg1: i32) -> (i32, i32, i32) {
    %c0_i32 = arith.constant 0 : i32
    %c0_i32_0 = arith.constant 0 : i32
    %c0_i32_1 = arith.constant 0 : i32
    return %arg0, %c0_i32, %c0_i32_0 : i32, i32, i32
  }
  func.func @transform_10(%arg0: i32, %arg1: i32) -> (i32, i32, i32) {
    %c0_i32 = arith.constant 0 : i32
    %c0_i32_0 = arith.constant 0 : i32
    %c0_i32_1 = arith.constant 0 : i32
    return %arg1, %c0_i32, %c0_i32_0 : i32, i32, i32
  }
}

</mosaic_0001>

<llo_original>
// kernel: vit_forward.1
$region0: #{vit_forward.1}
  #allocation0 [shape = 'u32[]', space=smem, size = 0x4, offset = 0x4, fixed_abs, tag = 'smem constant byte address 0x4 - core index']
  #allocation1 [shape = 'u32[144,128]{1,0:T(1,128)}', space=vmem, size = 0x12000, scoped, tag = 'internal scratch']
  #allocation2 [shape = 'f32[2,24,128]{2,1,0:T(8,128)}', space=vmem, size = 0x6000, scoped, tag = 'scratch operand']
  %s0 = inlined_call_operand.vmem [shape: bf16[2,16,128], index: 0, kind: input, shape index: {}]
  %s1 = inlined_call_operand.vmem [shape: bf16[128,128], index: 1, kind: input, shape index: {}]
  %s2 = inlined_call_operand.vmem [shape: f32[16,128], index: 2, kind: input, shape index: {}]
  %s3 = inlined_call_operand.hbm [shape: f32[8,128], index: 3, kind: input, shape index: {}]
  %s4 = inlined_call_operand.hbm [shape: f32[2,8,128], index: 4, kind: input, shape index: {}]
  %s5 = inlined_call_operand.vmem [shape: bf16[2,128,384], index: 5, kind: input, shape index: {}]
  %s6 = inlined_call_operand.hbm [shape: bf16[2,128,128], index: 6, kind: input, shape index: {}]
  %s7 = inlined_call_operand.vmem [shape: bf16[2,128,256], index: 7, kind: input, shape index: {}]
  %s8 = inlined_call_operand.hbm [shape: f32[2,1,256], index: 8, kind: input, shape index: {}]
  %s9 = inlined_call_operand.hbm [shape: bf16[2,256,128], index: 9, kind: input, shape index: {}]
  %s10 = inlined_call_operand.vmem [shape: f32[2,1,128], index: 10, kind: output, shape index: {}]
  %s11 = sld [smem:[#allocation0]]
  $region101: #{vit_forward.1} parent=0
    _
  %s13 = ssub.s32 1, %s11
  %s14 = scalar_select 0, %s13, %s11
  $region1: #{vit_forward.1} parent=0
    #allocation3 [shape = 'u8[4096]{0}', space=vmem, size = 0x1000, scoped, tag = 'input window, operand 3, single buffered']
    #allocation4 [shape = 's32[2]{0}', space=sflag, size = 0x8, scoped, tag = 'scoped memory for vit_forward.1']
    #allocation5 [shape = 'u8[8192]{0}', space=vmem, size = 0x2000, scoped, tag = 'input window, operand 4']
    #allocation6 [shape = 's32[2]{0}', space=sflag, size = 0x8, scoped, tag = 'scoped memory for vit_forward.1']
    #allocation7 [shape = 'u8[65536]{0}', space=vmem, size = 0x10000, scoped, tag = 'input window, operand 6']
    #allocation8 [shape = 'u8[2048]{0}', space=vmem, size = 0x800, scoped, tag = 'input window, operand 8']
    #allocation9 [shape = 's32[2]{0}', space=sflag, size = 0x8, scoped, tag = 'scoped memory for vit_forward.1']
    #allocation10 [shape = 'u8[131072]{0}', space=vmem, size = 0x20000, scoped, tag = 'input window, operand 9']
    %15 = vsyncpa [#allocation4], 0
    %16 = vsyncpa [#allocation6], 0
    %s17 = scalar_lea.sflag [#allocation6], 1
    %18 = vsyncpa %s17, 0
    %19 = vsyncpa [#allocation9], 0
    %s20 = scalar_lea.sflag [#allocation9], 1
    %21 = vsyncpa %s20, 0
    loop: start=0, step=1, limit=6
    $region2: #{vit_forward.1} parent=1 // loop_pre_header
      _
    $region3: #{vit_forward.1} parent=1 // loop_header
      %s23 = sphi 0, %s27
      %p24 = scmp.ge.s32.totalorder %s23, 6
      %s30 = sphi 0, %s42
      %s31 = sphi 0, %s38
      %s32 = sphi 0, %s30
      %s33 = sphi 0, %s31
      %s34 = sphi 0, %s32
      %s35 = sphi 0, %s33
      %s45 = sphi 0, %s47
      %s48 = sphi 0, %s45
      %s49 = sphi 0, %s48
      %s65 = sphi 0, %s49
      %s69 = sphi 0, %s69
      %s71 = sphi 0, %s69
      %s72 = sphi 0, %s71
      %s86 = sphi 0, %s72
      %s90 = sphi 0, %s90
      %s92 = sphi 0, %s90
      %s93 = sphi 0, %s92
      %s107 = sphi 0, %s93
      %s111 = sphi 0, %s111
      %s113 = sphi 0, %s111
      %s114 = sphi 0, %s113
      %s128 = sphi 0, %s114
      %s134 = sphi 0, %s136
      %s137 = sphi 0, %s134
      %s138 = sphi 0, %s137
      %s154 = sphi 0, %s138
      %s160 = sphi 0, %s162
      %s163 = sphi 0, %s160
      %s164 = sphi 0, %s163
      %s180 = sphi 0, %s164
      %s186 = sphi 0, %s188
      %s189 = sphi 0, %s186
      %s190 = sphi 0, %s189
      %s206 = sphi 0, %s190
      %s212 = sphi 0, %s214
      %s215 = sphi 0, %s212
      %s216 = sphi 0, %s215
      %s232 = sphi 0, %s216
      %s238 = sphi 0, %s240
      %s241 = sphi 0, %s238
      %s242 = sphi 0, %s241
      %s258 = sphi 0, %s242
      %s264 = sphi 0, %s266
      %s267 = sphi 0, %s264
      %s268 = sphi 0, %s267
      %s284 = sphi 0, %s268
      %s290 = sphi 0, %s292
      %s293 = sphi 0, %s290
      %s294 = sphi 0, %s293
      %s310 = sphi 0, %s294
    $region4: #{vit_forward.1} parent=1 // loop_header_branch
      %26 = sbr.rel (%p24) target = $region8
    $region5: #{vit_forward.1} parent=1 // loop_body
      %s28 = ssub.s32 %s23, 1
      %s29 = ssub.s32 %s23, 2
      %s36 = sadd.s32 1, %s31
      %p37 = scmp.ge.s32.totalorder %s36, 2
      %s38 = scalar_select %p37, 0, %s36
      %s39 = sadd.s32 1, %s30
      %s40 = scalar_select %p37, %s39, %s30
      %p41 = scmp.ge.s32.totalorder %s40, 2
      %s42 = scalar_select %p41, 0, %s40
      %s43 = ssub.s32 %s31, %s38
      %p44 = scmp.eq.s32.totalorder %s43, 0
      %s46 = sadd.s32 %s45, 1
      %s47 = scalar_select %p44, %s45, %s46
      %p50 = pneg %p44
      %p51 = scmp.eq.s32.totalorder %s23, 3
      %p52 = por %p50, %p51
      %p53 = scmp.ne.s32.totalorder %s45, %s48
      %p54 = scmp.eq.s32.totalorder %s23, 0
      %p55 = por %p53, %p54
      %p56 = scmp.ne.s32.totalorder %s45, %s48
      %p57 = scmp.eq.s32.totalorder %s28, 3
      %p58 = por %p56, %p57
      %p59 = scmp.ne.s32.totalorder %s48, %s49
      %p60 = scmp.eq.s32.totalorder %s28, 0
      %p61 = por %p59, %p60
      %p62 = scmp.ne.s32.totalorder %s48, %s49
      %p63 = scmp.eq.s32.totalorder %s29, 3
      %p64 = por %p62, %p63
      %p66 = scmp.ne.s32.totalorder %s49, %s65
      %p67 = scmp.eq.s32.totalorder %s29, 0
      %p68 = por %p66, %p67
      %s70 = sadd.s32 %s69, 1
      %p73 = scmp.eq.s32.totalorder %s23, 3
      %p74 = scmp.ne.s32.totalorder %s69, %s71
      %p75 = scmp.eq.s32.totalorder %s23, 0
      %p76 = por %p74, %p75
      %p77 = scmp.ne.s32.totalorder %s69, %s71
      %p78 = scmp.eq.s32.totalorder %s28, 3
      %p79 = por %p77, %p78
      %p80 = scmp.ne.s32.totalorder %s71, %s72
      %p81 = scmp.eq.s32.totalorder %s28, 0
      %p82 = por %p80, %p81
      %p83 = scmp.ne.s32.totalorder %s71, %s72
      %p84 = scmp.eq.s32.totalorder %s29, 3
      %p85 = por %p83, %p84
      %p87 = scmp.ne.s32.totalorder %s72, %s86
      %p88 = scmp.eq.s32.totalorder %s29, 0
      %p89 = por %p87, %p88
      %s91 = sadd.s32 %s90, 1
      %p94 = scmp.eq.s32.totalorder %s23, 3
      %p95 = scmp.ne.s32.totalorder %s90, %s92
      %p96 = scmp.eq.s32.totalorder %s23, 0
      %p97 = por %p95, %p96
      %p98 = scmp.ne.s32.totalorder %s90, %s92
      %p99 = scmp.eq.s32.totalorder %s28, 3
      %p100 = por %p98, %p99
      %p101 = scmp.ne.s32.totalorder %s92, %s93
      %p102 = scmp.eq.s32.totalorder %s28, 0
      %p103 = por %p101, %p102
      %p104 = scmp.ne.s32.totalorder %s92, %s93
      %p105 = scmp.eq.s32.totalorder %s29, 3
      %p106 = por %p104, %p105
      %p108 = scmp.ne.s32.totalorder %s93, %s107
      %p109 = scmp.eq.s32.totalorder %s29, 0
      %p110 = por %p108, %p109
      %s112 = sadd.s32 %s111, 1
      %p115 = scmp.eq.s32.totalorder %s23, 3
      %p116 = scmp.ne.s32.totalorder %s111, %s113
      %p117 = scmp.eq.s32.totalorder %s23, 0
      %p118 = por %p116, %p117
      %p119 = scmp.ne.s32.totalorder %s111, %s113
      %p120 = scmp.eq.s32.totalorder %s28, 3
      %p121 = por %p119, %p120
      %p122 = scmp.ne.s32.totalorder %s113, %s114
      %p123 = scmp.eq.s32.totalorder %s28, 0
      %p124 = por %p122, %p123
      %p125 = scmp.ne.s32.totalorder %s113, %s114
      %p126 = scmp.eq.s32.totalorder %s29, 3
      %p127 = por %p125, %p126
      %p129 = scmp.ne.s32.totalorder %s114, %s128
      %p130 = scmp.eq.s32.totalorder %s29, 0
      %p131 = por %p129, %p130
      %s132 = ssub.s32 %s30, %s42
      %p133 = scmp.eq.s32.totalorder %s132, 0
      %s135 = sadd.s32 %s134, 1
      %s136 = scalar_select %p133, %s134, %s135
      %p139 = pneg %p133
      %p140 = scmp.eq.s32.totalorder %s23, 3
      %p141 = por %p139, %p140
      %p142 = scmp.ne.s32.totalorder %s134, %s137
      %p143 = scmp.eq.s32.totalorder %s23, 0
      %p144 = por %p142, %p143
      %p145 = scmp.ne.s32.totalorder %s134, %s137
      %p146 = scmp.eq.s32.totalorder %s28, 3
      %p147 = por %p145, %p146
      %p148 = scmp.ne.s32.totalorder %s137, %s138
      %p149 = scmp.eq.s32.totalorder %s28, 0
      %p150 = por %p148, %p149
      %p151 = scmp.ne.s32.totalorder %s137, %s138
      %p152 = scmp.eq.s32.totalorder %s29, 3
      %p153 = por %p151, %p152
      %p155 = scmp.ne.s32.totalorder %s138, %s154
      %p156 = scmp.eq.s32.totalorder %s29, 0
      %p157 = por %p155, %p156
      %s158 = ssub.s32 %s30, %s42
      %p159 = scmp.eq.s32.totalorder %s158, 0
      %s161 = sadd.s32 %s160, 1
      %s162 = scalar_select %p159, %s160, %s161
      %p165 = pneg %p159
      %p166 = scmp.eq.s32.totalorder %s23, 3
      %p167 = por %p165, %p166
      %p168 = scmp.ne.s32.totalorder %s160, %s163
      %p169 = scmp.eq.s32.totalorder %s23, 0
      %p170 = por %p168, %p169
      %p171 = scmp.ne.s32.totalorder %s160, %s163
      %p172 = scmp.eq.s32.totalorder %s28, 3
      %p173 = por %p171, %p172
      %p174 = scmp.ne.s32.totalorder %s163, %s164
      %p175 = scmp.eq.s32.totalorder %s28, 0
      %p176 = por %p174, %p175
      %p177 = scmp.ne.s32.totalorder %s163, %s164
      %p178 = scmp.eq.s32.totalorder %s29, 3
      %p179 = por %p177, %p178
      %p181 = scmp.ne.s32.totalorder %s164, %s180
      %p182 = scmp.eq.s32.totalorder %s29, 0
      %p183 = por %p181, %p182
      %s184 = ssub.s32 %s30, %s42
      %p185 = scmp.eq.s32.totalorder %s184, 0
      %s187 = sadd.s32 %s186, 1
      %s188 = scalar_select %p185, %s186, %s187
      %p191 = pneg %p185
      %p192 = scmp.eq.s32.totalorder %s23, 3
      %p193 = por %p191, %p192
      %p194 = scmp.ne.s32.totalorder %s186, %s189
      %p195 = scmp.eq.s32.totalorder %s23, 0
      %p196 = por %p194, %p195
      %p197 = scmp.ne.s32.totalorder %s186, %s189
      %p198 = scmp.eq.s32.totalorder %s28, 3
      %p199 = por %p197, %p198
      %p200 = scmp.ne.s32.totalorder %s189, %s190
      %p201 = scmp.eq.s32.totalorder %s28, 0
      %p202 = por %p200, %p201
      %p203 = scmp.ne.s32.totalorder %s189, %s190
      %p204 = scmp.eq.s32.totalorder %s29, 3
      %p205 = por %p203, %p204
      %p207 = scmp.ne.s32.totalorder %s190, %s206
      %p208 = scmp.eq.s32.totalorder %s29, 0
      %p209 = por %p207, %p208
      %s210 = ssub.s32 %s30, %s42
      %p211 = scmp.eq.s32.totalorder %s210, 0
      %s213 = sadd.s32 %s212, 1
      %s214 = scalar_select %p211, %s212, %s213
      %p217 = pneg %p211
      %p218 = scmp.eq.s32.totalorder %s23, 3
      %p219 = por %p217, %p218
      %p220 = scmp.ne.s32.totalorder %s212, %s215
      %p221 = scmp.eq.s32.totalorder %s23, 0
      %p222 = por %p220, %p221
      %p223 = scmp.ne.s32.totalorder %s212, %s215
      %p224 = scmp.eq.s32.totalorder %s28, 3
      %p225 = por %p223, %p224
      %p226 = scmp.ne.s32.totalorder %s215, %s216
      %p227 = scmp.eq.s32.totalorder %s28, 0
      %p228 = por %p226, %p227
      %p229 = scmp.ne.s32.totalorder %s215, %s216
      %p230 = scmp.eq.s32.totalorder %s29, 3
      %p231 = por %p229, %p230
      %p233 = scmp.ne.s32.totalorder %s216, %s232
      %p234 = scmp.eq.s32.totalorder %s29, 0
      %p235 = por %p233, %p234
      %s236 = ssub.s32 %s30, %s42
      %p237 = scmp.eq.s32.totalorder %s236, 0
      %s239 = sadd.s32 %s238, 1
      %s240 = scalar_select %p237, %s238, %s239
      %p243 = pneg %p237
      %p244 = scmp.eq.s32.totalorder %s23, 3
      %p245 = por %p243, %p244
      %p246 = scmp.ne.s32.totalorder %s238, %s241
      %p247 = scmp.eq.s32.totalorder %s23, 0
      %p248 = por %p246, %p247
      %p249 = scmp.ne.s32.totalorder %s238, %s241
      %p250 = scmp.eq.s32.totalorder %s28, 3
      %p251 = por %p249, %p250
      %p252 = scmp.ne.s32.totalorder %s241, %s242
      %p253 = scmp.eq.s32.totalorder %s28, 0
      %p254 = por %p252, %p253
      %p255 = scmp.ne.s32.totalorder %s241, %s242
      %p256 = scmp.eq.s32.totalorder %s29, 3
      %p257 = por %p255, %p256
      %p259 = scmp.ne.s32.totalorder %s242, %s258
      %p260 = scmp.eq.s32.totalorder %s29, 0
      %p261 = por %p259, %p260
      %s262 = ssub.s32 %s30, %s42
      %p263 = scmp.eq.s32.totalorder %s262, 0
      %s265 = sadd.s32 %s264, 1
      %s266 = scalar_select %p263, %s264, %s265
      %p269 = pneg %p263
      %p270 = scmp.eq.s32.totalorder %s23, 3
      %p271 = por %p269, %p270
      %p272 = scmp.ne.s32.totalorder %s264, %s267
      %p273 = scmp.eq.s32.totalorder %s23, 0
      %p274 = por %p272, %p273
      %p275 = scmp.ne.s32.totalorder %s264, %s267
      %p276 = scmp.eq.s32.totalorder %s28, 3
      %p277 = por %p275, %p276
      %p278 = scmp.ne.s32.totalorder %s267, %s268
      %p279 = scmp.eq.s32.totalorder %s28, 0
      %p280 = por %p278, %p279
      %p281 = scmp.ne.s32.totalorder %s267, %s268
      %p282 = scmp.eq.s32.totalorder %s29, 3
      %p283 = por %p281, %p282
      %p285 = scmp.ne.s32.totalorder %s268, %s284
      %p286 = scmp.eq.s32.totalorder %s29, 0
      %p287 = por %p285, %p286
      %s288 = ssub.s32 %s31, %s38
      %p289 = scmp.eq.s32.totalorder %s288, 0
      %s291 = sadd.s32 %s290, 1
      %s292 = scalar_select %p289, %s290, %s291
      %p295 = pneg %p289
      %p296 = scmp.eq.s32.totalorder %s23, 3
      %p297 = por %p295, %p296
      %p298 = scmp.ne.s32.totalorder %s290, %s293
      %p299 = scmp.eq.s32.totalorder %s23, 0
      %p300 = por %p298, %p299
      %p301 = scmp.ne.s32.totalorder %s290, %s293
      %p302 = scmp.eq.s32.totalorder %s28, 3
      %p303 = por %p301, %p302
      %p304 = scmp.ne.s32.totalorder %s293, %s294
      %p305 = scmp.eq.s32.totalorder %s28, 0
      %p306 = por %p304, %p305
      %p307 = scmp.ne.s32.totalorder %s293, %s294
      %p308 = scmp.eq.s32.totalorder %s29, 3
      %p309 = por %p307, %p308
      %p311 = scmp.ne.s32.totalorder %s294, %s310
      %p312 = scmp.eq.s32.totalorder %s29, 0
      %p313 = por %p311, %p312
      %p314 = scmp.le.s32.totalorder 1, %s23
      %p315 = scmp.lt.s32.totalorder %s23, 5
      %p316 = pnand %p314, %p315
      %p317 = pneg %p316
      // Predicated region
      $region9: #{vit_forward.1} parent=5 // pred_check
        _
      $region10: #{vit_forward.1} parent=5 // pred_check_branch
        %319 = sbr.rel (%p316) target = $region12
      $region11: #{vit_forward.1} parent=5 // pred_region
        %s320 = ssub.s32 %s23, 1
        // Predicated region
        $region13: #{vit_forward.1} parent=11 // pred_check
          %p321 = pneg %p82
        $region14: #{vit_forward.1} parent=11 // pred_check_branch
          %323 = sbr.rel (%p321) target = $region16
        $region15: #{vit_forward.1} parent=11 // pred_region
          _
        $region16: #{vit_forward.1} parent=11 // pred_fallthru
          _
        // Predicated region
        $region17: #{vit_forward.1} parent=11 // pred_check
          %p324 = pneg %p103
        $region18: #{vit_forward.1} parent=11 // pred_check_branch
          %326 = sbr.rel (%p324) target = $region20
        $region19: #{vit_forward.1} parent=11 // pred_region
          _
        $region20: #{vit_forward.1} parent=11 // pred_fallthru
          _
        // Predicated region
        $region21: #{vit_forward.1} parent=11 // pred_check
          %p327 = pneg %p124
        $region22: #{vit_forward.1} parent=11 // pred_check_branch
          %329 = sbr.rel (%p327) target = $region24
        $region23: #{vit_forward.1} parent=11 // pred_region
          %s331 = ssub.s32 128, 128
          %332 = vsyncadd [#allocation4], %s331
          %s334 = sshll.u32 [#allocation3], 4
          %s335 = int_to_ptr.vmem [resolvable:$true] %s334
          %337 = dma.hbm_to_vmem [thread:$0]  %s3, 128, %s335, [#allocation4]
        $region24: #{vit_forward.1} parent=11 // pred_fallthru
          _
      $region12: #{vit_forward.1} parent=5 // pred_fallthru
        _
      %p338 = scmp.lt.s32.totalorder %s23, 4
      // Predicated region
      $region25: #{vit_forward.1} parent=5 // pred_check
        %p339 = pneg %p338
      $region26: #{vit_forward.1} parent=5 // pred_check_branch
        %341 = sbr.rel (%p339) target = $region28
      $region27: #{vit_forward.1} parent=5 // pred_region
        // Predicated region
        $region29: #{vit_forward.1} parent=27 // pred_check
          %p342 = pneg %p55
        $region30: #{vit_forward.1} parent=27 // pred_check_branch
          %344 = sbr.rel (%p342) target = $region32
        $region31: #{vit_forward.1} parent=27 // pred_region
          %p345 = scmp.lt.s32.totalorder %s31, 1
          %s346 = scalar_select %p345, %s31, 1
          %s347 = smul.addr %s346, 2
          %s348 = smul.addr %s347, 4
          %s349 = scalar_lea.vmem %s0, %s348
        $region32: #{vit_forward.1} parent=27 // pred_fallthru
          _
        // Predicated region
        $region33: #{vit_forward.1} parent=27 // pred_check
          %p350 = pneg %p144
        $region34: #{vit_forward.1} parent=27 // pred_check_branch
          %352 = sbr.rel (%p350) target = $region36
        $region35: #{vit_forward.1} parent=27 // pred_region
          %s353 = sand.u32 %s23, 1
          %s354 = scalar_lea.sflag [#allocation6], %s353
          %s355 = sand.u32 %s134, 1
          %s356 = smul.addr %s355, 8
          %s357 = scalar_lea.vmem [#allocation5], %s356
          %s359 = ssub.s32 128, 128
          %360 = vsyncadd %s354, %s359
          %s361 = smul.addr %s30, 128
          %s362 = scalar_lea.hbm %s4, %s361
          %s364 = sshll.u32 %s357, 4
          %s365 = int_to_ptr.vmem [resolvable:$true] %s364
          %367 = dma.hbm_to_vmem [thread:$0]  %s362, 128, %s365, %s354
        $region36: #{vit_forward.1} parent=27 // pred_fallthru
          _
        // Predicated region
        $region37: #{vit_forward.1} parent=27 // pred_check
          %p368 = pneg %p170
        $region38: #{vit_forward.1} parent=27 // pred_check_branch
          %370 = sbr.rel (%p368) target = $region40
        $region39: #{vit_forward.1} parent=27 // pred_region
          %p371 = scmp.lt.s32.totalorder %s30, 1
          %s372 = scalar_select %p371, %s30, 1
          %s373 = smul.addr %s372, 48
          %s374 = smul.addr %s373, 4
          %s375 = scalar_lea.vmem %s5, %s374
        $region40: #{vit_forward.1} parent=27 // pred_fallthru
          _
        // Predicated region
        $region41: #{vit_forward.1} parent=27 // pred_check
          %p376 = pneg %p196
        $region42: #{vit_forward.1} parent=27 // pred_check_branch
          %378 = sbr.rel (%p376) target = $region44
        $region43: #{vit_forward.1} parent=27 // pred_region
          %s379 = sand.u32 %s23, 1
          %s380 = scalar_lea.sflag [#allocation6], %s379
          %s381 = sand.u32 %s186, 1
          %s382 = smul.addr %s381, 64
          %s383 = scalar_lea.vmem [#allocation7], %s382
          %s385 = ssub.s32 1024, 1024
          %386 = vsyncadd %s380, %s385
          %s387 = smul.addr %s30, 16
          %s388 = smul.addr %s387, 64
          %s389 = scalar_lea.hbm %s6, %s388
          %s390 = sshll.u32 %s383, 4
          %s391 = int_to_ptr.vmem [resolvable:$true] %s390
          %396 = dma.hbm_to_vmem [thread:$0]  %s389, 1024, %s391, %s380, 64, 64, 4
        $region44: #{vit_forward.1} parent=27 // pred_fallthru
          _
        // Predicated region
        $region45: #{vit_forward.1} parent=27 // pred_check
          %p397 = pneg %p222
        $region46: #{vit_forward.1} parent=27 // pred_check_branch
          %399 = sbr.rel (%p397) target = $region48
        $region47: #{vit_forward.1} parent=27 // pred_region
          %p400 = scmp.lt.s32.totalorder %s30, 1
          %s401 = scalar_select %p400, %s30, 1
          %s402 = smul.addr %s401, 32
          %s403 = smul.addr %s402, 4
          %s404 = scalar_lea.vmem %s7, %s403
        $region48: #{vit_forward.1} parent=27 // pred_fallthru
          _
        // Predicated region
        $region49: #{vit_forward.1} parent=27 // pred_check
          %p405 = pneg %p248
        $region50: #{vit_forward.1} parent=27 // pred_check_branch
          %407 = sbr.rel (%p405) target = $region52
        $region51: #{vit_forward.1} parent=27 // pred_region
          %s408 = sand.u32 %s23, 1
          %s409 = scalar_lea.sflag [#allocation9], %s408
          %s410 = sand.u32 %s238, 1
          %s411 = smul.addr %s410, 2
          %s412 = scalar_lea.vmem [#allocation8], %s411
          %s414 = ssub.s32 32, 32
          %415 = vsyncadd %s409, %s414
          %s416 = smul.addr %s30, 2
          %s417 = smul.addr %s416, 16
          %s418 = scalar_lea.hbm %s8, %s417
          %s420 = sshll.u32 %s412, 4
          %s421 = int_to_ptr.vmem [resolvable:$true] %s420
          %423 = dma.hbm_to_vmem [thread:$0]  %s418, 32, %s421, %s409
        $region52: #{vit_forward.1} parent=27 // pred_fallthru
          _
        // Predicated region
        $region53: #{vit_forward.1} parent=27 // pred_check
          %p424 = pneg %p274
        $region54: #{vit_forward.1} parent=27 // pred_check_branch
          %426 = sbr.rel (%p424) target = $region56
        $region55: #{vit_forward.1} parent=27 // pred_region
          %s427 = sand.u32 %s23, 1
          %s428 = scalar_lea.sflag [#allocation9], %s427
          %s429 = sand.u32 %s264, 1
          %s430 = smul.addr %s429, 128
          %s431 = scalar_lea.vmem [#allocation10], %s430
          %s433 = ssub.s32 2048, 2048
          %434 = vsyncadd %s428, %s433
          %s435 = smul.addr %s30, 32
          %s436 = smul.addr %s435, 64
          %s437 = scalar_lea.hbm %s9, %s436
          %s438 = sshll.u32 %s431, 4
          %s439 = int_to_ptr.vmem [resolvable:$true] %s438
          %444 = dma.hbm_to_vmem [thread:$0]  %s437, 2048, %s439, %s428, 64, 64, 4
        $region56: #{vit_forward.1} parent=27 // pred_fallthru
          _
      $region28: #{vit_forward.1} parent=5 // pred_fallthru
        _
      %p445 = scmp.le.s32.totalorder 1, %s23
      %p446 = scmp.lt.s32.totalorder %s23, 5
      %p447 = pnand %p445, %p446
      %p448 = pneg %p447
      // Predicated region
      $region57: #{vit_forward.1} parent=5 // pred_check
        _
      $region58: #{vit_forward.1} parent=5 // pred_check_branch
        %450 = sbr.rel (%p447) target = $region60
      $region59: #{vit_forward.1} parent=5 // pred_region
        %s451 = ssub.s32 %s23, 1
        // Predicated region
        $region61: #{vit_forward.1} parent=59 // pred_check
          %p452 = pneg %p124
        $region62: #{vit_forward.1} parent=59 // pred_check_branch
          %454 = sbr.rel (%p452) target = $region64
        $region63: #{vit_forward.1} parent=59 // pred_region
          %455 = dma.done [#allocation4], 128
        $region64: #{vit_forward.1} parent=59 // pred_fallthru
          _
        %s456 = sand.u32 %s28, 1
        %s457 = scalar_lea.sflag [#allocation6], %s456
        %s458 = sand.u32 %s137, 1
        %s459 = smul.addr %s458, 8
        %s460 = scalar_lea.vmem [#allocation5], %s459
        // Predicated region
        $region65: #{vit_forward.1} parent=59 // pred_check
          %p461 = pneg %p150
        $region66: #{vit_forward.1} parent=59 // pred_check_branch
          %463 = sbr.rel (%p461) target = $region68
        $region67: #{vit_forward.1} parent=59 // pred_region
          %464 = dma.done %s457, 128
        $region68: #{vit_forward.1} parent=59 // pred_fallthru
          _
        %s465 = sand.u32 %s28, 1
        %s466 = scalar_lea.sflag [#allocation6], %s465
        %s467 = sand.u32 %s189, 1
        %s468 = smul.addr %s467, 64
        %s469 = scalar_lea.vmem [#allocation7], %s468
        // Predicated region
        $region69: #{vit_forward.1} parent=59 // pred_check
          %p470 = pneg %p202
        $region70: #{vit_forward.1} parent=59 // pred_check_branch
          %472 = sbr.rel (%p470) target = $region72
        $region71: #{vit_forward.1} parent=59 // pred_region
          %473 = dma.done %s466, 1024
        $region72: #{vit_forward.1} parent=59 // pred_fallthru
          _
        %s474 = sand.u32 %s28, 1
        %s475 = scalar_lea.sflag [#allocation9], %s474
        %s476 = sand.u32 %s241, 1
        %s477 = smul.addr %s476, 2
        %s478 = scalar_lea.vmem [#allocation8], %s477
        // Predicated region
        $region73: #{vit_forward.1} parent=59 // pred_check
          %p479 = pneg %p254
        $region74: #{vit_forward.1} parent=59 // pred_check_branch
          %481 = sbr.rel (%p479) target = $region76
        $region75: #{vit_forward.1} parent=59 // pred_region
          %482 = dma.done %s475, 32
        $region76: #{vit_forward.1} parent=59 // pred_fallthru
          _
        %s483 = sand.u32 %s28, 1
        %s484 = scalar_lea.sflag [#allocation9], %s483
        %s485 = sand.u32 %s267, 1
        %s486 = smul.addr %s485, 128
        %s487 = scalar_lea.vmem [#allocation10], %s486
        // Predicated region
        $region77: #{vit_forward.1} parent=59 // pred_check
          %p488 = pneg %p280
        $region78: #{vit_forward.1} parent=59 // pred_check_branch
          %490 = sbr.rel (%p488) target = $region80
        $region79: #{vit_forward.1} parent=59 // pred_region
          %491 = dma.done %s484, 2048
        $region80: #{vit_forward.1} parent=59 // pred_fallthru
          _
        %p492 = scmp.lt.s32.totalorder %s33, 1
        %s493 = scalar_select %p492, %s33, 1
        %s494 = smul.addr %s493, 2
        %s495 = smul.addr %s494, 4
        %s496 = scalar_lea.vmem %s0, %s495
        %p497 = pneg %p61
        %p498 = pneg %p58
        %p499 = pneg %p82
        %p500 = pneg %p79
        %p501 = pneg %p103
        %p502 = pneg %p100
        %p503 = pneg %p124
        %p504 = pneg %p121
        %s505 = sand.u32 %s28, 1
        %s506 = scalar_lea.sflag [#allocation6], %s505
        %s507 = sand.u32 %s137, 1
        %s508 = smul.addr %s507, 8
        %s509 = scalar_lea.vmem [#allocation5], %s508
        %p510 = pneg %p150
        %p511 = pneg %p147
        %p512 = scmp.lt.s32.totalorder %s32, 1
        %s513 = scalar_select %p512, %s32, 1
        %s514 = smul.addr %s513, 48
        %s515 = smul.addr %s514, 4
        %s516 = scalar_lea.vmem %s5, %s515
        %p517 = pneg %p176
        %p518 = pneg %p173
        %s519 = sand.u32 %s28, 1
        %s520 = scalar_lea.sflag [#allocation6], %s519
        %s521 = sand.u32 %s189, 1
        %s522 = smul.addr %s521, 64
        %s523 = scalar_lea.vmem [#allocation7], %s522
        %p524 = pneg %p202
        %p525 = pneg %p199
        %p526 = scmp.lt.s32.totalorder %s32, 1
        %s527 = scalar_select %p526, %s32, 1
        %s528 = smul.addr %s527, 32
        %s529 = smul.addr %s528, 4
        %s530 = scalar_lea.vmem %s7, %s529
        %p531 = pneg %p228
        %p532 = pneg %p225
        %s533 = sand.u32 %s28, 1
        %s534 = scalar_lea.sflag [#allocation9], %s533
        %s535 = sand.u32 %s241, 1
        %s536 = smul.addr %s535, 2
        %s537 = scalar_lea.vmem [#allocation8], %s536
        %p538 = pneg %p254
        %p539 = pneg %p251
        %s540 = sand.u32 %s28, 1
        %s541 = scalar_lea.sflag [#allocation9], %s540
        %s542 = sand.u32 %s267, 1
        %s543 = smul.addr %s542, 128
        %s544 = scalar_lea.vmem [#allocation10], %s543
        %p545 = pneg %p280
        %p546 = pneg %p277
        %p547 = pneg %p306
        %p548 = pneg %p303
        %p549 = scmp.lt.s32.totalorder %s33, 1
        %s550 = scalar_select %p549, %s33, 1
        %s551 = scalar_lea.vmem %s10, %s550
        %p552 = scmp.lt.s32.totalorder %s33, 1
        %s553 = scalar_select %p552, %s33, 1
        %s554 = smul.addr %s553, 2
        %s555 = smul.addr %s554, 4
        %s556 = scalar_lea.vmem %s0, %s555
        %p557 = scmp.lt.s32.totalorder %s32, 1
        %s558 = scalar_select %p557, %s32, 1
        %s559 = smul.addr %s558, 48
        %s560 = smul.addr %s559, 4
        %s561 = scalar_lea.vmem %s5, %s560
        %p562 = scmp.lt.s32.totalorder %s32, 1
        %s563 = scalar_select %p562, %s32, 1
        %s564 = smul.addr %s563, 32
        %s565 = smul.addr %s564, 4
        %s566 = scalar_lea.vmem %s7, %s565
        %p567 = scmp.lt.s32.totalorder %s33, 1
        %s568 = scalar_select %p567, %s33, 1
        %s569 = scalar_lea.vmem %s10, %s568
        %p571 = scmp.eq.s32.totalorder %s32, 0
        // Predicated region
        $region81: #{vit_forward.1} parent=59 // pred_check
          %p572 = pneg %p571
        $region82: #{vit_forward.1} parent=59 // pred_check_branch
          %574 = sbr.rel (%p572) target = $region84
        $region83: #{vit_forward.1} parent=59 // pred_region
          %v575 = vld [vmem:[%s556] sm:$0xf]
          %v576 = vld [vmem:[%s556 + $0x4] sm:$0xf]
          %v577 = vld [vmem:[%s1] sm:$0xf]
          %v578 = vld [vmem:[%s1 + $0x4] sm:$0xf]
          %v579 = vld [vmem:[%s1 + $0x8] sm:$0xf]
          %v580 = vld [vmem:[%s1 + $0xc] sm:$0xf]
          %v581 = vld [vmem:[%s1 + $0x10] sm:$0xf]
          %v582 = vld [vmem:[%s1 + $0x14] sm:$0xf]
          %v583 = vld [vmem:[%s1 + $0x18] sm:$0xf]
          %v584 = vld [vmem:[%s1 + $0x1c] sm:$0xf]
          %v585 = vld [vmem:[%s1 + $0x20] sm:$0xf]
          %v586 = vld [vmem:[%s1 + $0x24] sm:$0xf]
          %v587 = vld [vmem:[%s1 + $0x28] sm:$0xf]
          %v588 = vld [vmem:[%s1 + $0x2c] sm:$0xf]
          %v589 = vld [vmem:[%s1 + $0x30] sm:$0xf]
          %v590 = vld [vmem:[%s1 + $0x34] sm:$0xf]
          %v591 = vld [vmem:[%s1 + $0x38] sm:$0xf]
          %v592 = vld [vmem:[%s1 + $0x3c] sm:$0xf]
          %v593 = vld [vmem:[#allocation3 + $0x1] sm:$0x1]
          %v594 = vlaneseq
          %v595 = vshrl.u32 %v594, 7
          %v596 = vsub.s32 0, %v595
          %v597 = vrot.slane %v593, %v596
          %v600 = vunpack.c.l.b16 %v575
          %v601 = vunpack.c.l.b16 %v576
          %v602 = vpack.c.b16 %v601, %v600
          %v620 = vunpack.c.l.b16 %v577
          %v621 = vunpack.c.l.b16 %v578
          %v622 = vunpack.c.l.b16 %v579
          %v623 = vunpack.c.l.b16 %v580
          %v624 = vunpack.c.l.b16 %v581
          %v625 = vunpack.c.l.b16 %v582
          %v626 = vunpack.c.l.b16 %v583
          %v627 = vunpack.c.l.b16 %v584
          %v628 = vunpack.c.l.b16 %v585
          %v629 = vunpack.c.l.b16 %v586
          %v630 = vunpack.c.l.b16 %v587
          %v631 = vunpack.c.l.b16 %v588
          %v632 = vunpack.c.l.b16 %v589
          %v633 = vunpack.c.l.b16 %v590
          %v634 = vunpack.c.l.b16 %v591
          %v635 = vunpack.c.l.b16 %v592
          %v636 = vpack.c.b16 %v621, %v620
          %v637 = vpack.c.b16 %v623, %v622
          %v638 = vpack.c.b16 %v625, %v624
          %v639 = vpack.c.b16 %v627, %v626
          %v640 = vpack.c.b16 %v629, %v628
          %v641 = vpack.c.b16 %v631, %v630
          %v642 = vpack.c.b16 %v633, %v632
          %v643 = vpack.c.b16 %v635, %v634
          %652 = vmatprep.subr.bf16.mxu0 0
          %653 = vmatpush1.bf16.msra.mxu0 %v636
          %654 = vmatprep.subr.bf16.mxu0 0
          %655 = vmatpush1.bf16.msra.mxu0 %v637
          %656 = vmatprep.subr.bf16.mxu0 0
          %657 = vmatpush1.bf16.msra.mxu0 %v638
          %658 = vmatprep.subr.bf16.mxu0 0
          %659 = vmatpush1.bf16.msra.mxu0 %v639
          %660 = vmatprep.subr.bf16.mxu0 0
          %661 = vmatpush1.bf16.msra.mxu0 %v640
          %662 = vmatprep.subr.bf16.mxu0 0
          %663 = vmatpush1.bf16.msra.mxu0 %v641
          %664 = vmatprep.subr.bf16.mxu0 0
          %665 = vmatpush1.bf16.msra.mxu0 %v642
          %666 = vmatprep.subr.bf16.mxu0 0
          %667 = vmatpush1.bf16.msra.mxu0 %v643
          %668 = vmatprep.subr.bf16.mxu0 0
          %669 = vmatpush1.bf16.msra.mxu0 0
          %670 = vmatprep.subr.bf16.mxu0 0
          %671 = vmatpush1.bf16.msra.mxu0 0
          %672 = vmatprep.subr.bf16.mxu0 0
          %673 = vmatpush1.bf16.msra.mxu0 0
          %674 = vmatprep.subr.bf16.mxu0 0
          %675 = vmatpush1.bf16.msra.mxu0 0
          %676 = vmatprep.subr.bf16.mxu0 0
          %677 = vmatpush1.bf16.msra.mxu0 0
          %678 = vmatprep.subr.bf16.mxu0 0
          %679 = vmatpush1.bf16.msra.mxu0 0
          %680 = vmatprep.subr.bf16.mxu0 0
          %681 = vmatpush1.bf16.msra.mxu0 0
          %682 = vmatprep.subr.bf16.mxu0 0
          %683 = vmatpush1.bf16.msra.mxu0 0
          %684 = vmatprep.mubr.bf16.mxu0 0
          %685 = vmatmul.mubr.bf16.gmra.mrb[0].mxu0 %v602
          %v686 = vpop.f32.mrb[0].mxu0
          %v687 = vadd.f32 %v597, %v686
          %v688 = vpop.f32.mrb[0].mxu0
          %v689 = vpop.f32.mrb[0].mxu0
          %v690 = vadd.f32 %v597, %v689
          %v691 = vpop.f32.mrb[0].mxu0
          %692 = vdwg.mxu0
          %v693 = vld [vmem:[%s2] sm:$0xff]
          %v694 = vld [vmem:[%s2 + $0x8] sm:$0xff]
          %v695 = vadd.f32 %v687, %v693
          %v696 = vadd.f32 %v690, %v694
          %v697 = vld [vmem:[#allocation3] sm:$0x1]
          %vm700 = vcmask 1040384
          %v701 = vrot.slane %v695, 7
          %v702 = vrot.slane %v696, 7
          %v703 = vsel %vm700, %v701, %v702
          %v707 = vsel %vm700, %v697, %v701
          %v708 = vsel %vm700, %v702, 0.0
          %s709 = smul.u32 %s33, 24
          %s710 = scalar_lea.vmem [#allocation2], %s709
          %711 = vst [vmem:[%s710] sm:$0xff] %v707
          %712 = vst [vmem:[%s710 + $0x8] sm:$0xff] %v703
          %713 = vst [vmem:[%s710 + $0x10] sm:$0xff] %v708
        $region84: #{vit_forward.1} parent=59 // pred_fallthru
          _
        %s714 = smul.u32 %s33, 24
        %s715 = scalar_lea.vmem [#allocation2], %s714
        %v716 = vld [vmem:[%s715] sm:$0xff]
        %v717 = vld [vmem:[%s715 + $0x8] sm:$0xff]
        %v718 = vld [vmem:[%s715 + $0x10] sm:$0xff]
        %v719 = vld [vmem:[%s460] sm:$0xff]
        %720 = vadd.xlane.f32.xlu0 %v716
        %v721 = vpop.xlane.xlu0 %720
        %722 = vadd.xlane.f32.xlu0 %v717
        %v723 = vpop.xlane.xlu0 %722
        %724 = vadd.xlane.f32.xlu0 %v718
        %v725 = vpop.xlane.xlu0 %724
        %v726 = vrcp.pop 128.0
        %v727 = vmul.f32 %v721, %v726
        %v728 = vmul.f32 %v723, %v726
        %v729 = vmul.f32 %v725, %v726
        %v730 = vsub.f32 %v716, %v727
        %v731 = vsub.f32 %v717, %v728
        %v732 = vsub.f32 %v718, %v729
        %v733 = vmul.f32 %v730, %v730
        %v734 = vmul.f32 %v731, %v731
        %v735 = vmul.f32 %v732, %v732
        %736 = vadd.xlane.f32.xlu0 %v733
        %v737 = vpop.xlane.xlu0 %736
        %738 = vadd.xlane.f32.xlu0 %v734
        %v739 = vpop.xlane.xlu0 %738
        %740 = vadd.xlane.f32.xlu0 %v735
        %v741 = vpop.xlane.xlu0 %740
        %v742 = vmul.f32 %v737, %v726
        %v743 = vmul.f32 %v739, %v726
        %v744 = vmul.f32 %v741, %v726
        %v745 = vadd.f32 %v742, 1e-05
        %v746 = vadd.f32 %v743, 1e-05
        %v747 = vadd.f32 %v744, 1e-05
        %v748 = vrsqrt.pop %v745
        %v749 = vrsqrt.pop %v746
        %v750 = vrsqrt.pop %v747
        %v751 = vmul.f32 %v730, %v748
        %v752 = vmul.f32 %v731, %v749
        %v753 = vmul.f32 %v732, %v750
        %v754 = vlaneseq
        %v755 = vshrl.u32 %v754, 7
        %v756 = vsub.s32 0, %v755
        %v757 = vrot.slane %v719, %v756
        %v758 = vmul.f32 %v751, %v757
        %v759 = vmul.f32 %v752, %v757
        %v760 = vmul.f32 %v753, %v757
        %v761 = vlaneseq
        %v762 = vshrl.u32 %v761, 7
        %v763 = vsub.s32 1, %v762
        %v764 = vrot.slane %v719, %v763
        %v765 = vadd.f32 %v758, %v764
        %v766 = vadd.f32 %v759, %v764
        %v767 = vadd.f32 %v760, %v764
        %v768 = vpack.c.bf16 %v766, %v765
        %v769 = vpack.c.bf16 %v767, %v767
        %v770 = vld [vmem:[%s561] sm:$0xff]
        %v771 = vld [vmem:[%s561 + $0x8] sm:$0xf]
        %v772 = vld [vmem:[%s561 + $0xc] sm:$0xff]
        %v773 = vld [vmem:[%s561 + $0x14] sm:$0xf]
        %v774 = vld [vmem:[%s561 + $0x18] sm:$0xff]
        %v775 = vld [vmem:[%s561 + $0x20] sm:$0xf]
        %v776 = vld [vmem:[%s561 + $0x24] sm:$0xff]
        %v777 = vld [vmem:[%s561 + $0x2c] sm:$0xf]
        %v778 = vld [vmem:[%s561 + $0x30] sm:$0xff]
        %v779 = vld [vmem:[%s561 + $0x38] sm:$0xf]
        %v780 = vld [vmem:[%s561 + $0x3c] sm:$0xff]
        %v781 = vld [vmem:[%s561 + $0x44] sm:$0xf]
        %v782 = vld [vmem:[%s561 + $0x48] sm:$0xff]
        %v783 = vld [vmem:[%s561 + $0x50] sm:$0xf]
        %v784 = vld [vmem:[%s561 + $0x54] sm:$0xff]
        %v785 = vld [vmem:[%s561 + $0x5c] sm:$0xf]
        %v786 = vld [vmem:[%s561 + $0x60] sm:$0xff]
        %v787 = vld [vmem:[%s561 + $0x68] sm:$0xf]
        %v788 = vld [vmem:[%s561 + $0x6c] sm:$0xff]
        %v789 = vld [vmem:[%s561 + $0x74] sm:$0xf]
        %v790 = vld [vmem:[%s561 + $0x78] sm:$0xff]
        %v791 = vld [vmem:[%s561 + $0x80] sm:$0xf]
        %v792 = vld [vmem:[%s561 + $0x84] sm:$0xff]
        %v793 = vld [vmem:[%s561 + $0x8c] sm:$0xf]
        %v794 = vld [vmem:[%s561 + $0x90] sm:$0xff]
        %v795 = vld [vmem:[%s561 + $0x98] sm:$0xf]
        %v796 = vld [vmem:[%s561 + $0x9c] sm:$0xff]
        %v797 = vld [vmem:[%s561 + $0xa4] sm:$0xf]
        %v798 = vld [vmem:[%s561 + $0xa8] sm:$0xff]
        %v799 = vld [vmem:[%s561 + $0xb0] sm:$0xf]
        %v800 = vld [vmem:[%s561 + $0xb4] sm:$0xff]
        %v801 = vld [vmem:[%s561 + $0xbc] sm:$0xf]
        %v834 = vunpack.c.l.b16 %v770
        %v835 = vunpack.c.h.b16 %v770
        %v836 = vunpack.c.l.b16 %v771
        %v837 = vunpack.c.l.b16 %v772
        %v838 = vunpack.c.h.b16 %v772
        %v839 = vunpack.c.l.b16 %v773
        %v840 = vunpack.c.l.b16 %v774
        %v841 = vunpack.c.h.b16 %v774
        %v842 = vunpack.c.l.b16 %v775
        %v843 = vunpack.c.l.b16 %v776
        %v844 = vunpack.c.h.b16 %v776
        %v845 = vunpack.c.l.b16 %v777
        %v846 = vunpack.c.l.b16 %v778
        %v847 = vunpack.c.h.b16 %v778
        %v848 = vunpack.c.l.b16 %v779
        %v849 = vunpack.c.l.b16 %v780
        %v850 = vunpack.c.h.b16 %v780
        %v851 = vunpack.c.l.b16 %v781
        %v852 = vunpack.c.l.b16 %v782
        %v853 = vunpack.c.h.b16 %v782
        %v854 = vunpack.c.l.b16 %v783
        %v855 = vunpack.c.l.b16 %v784
        %v856 = vunpack.c.h.b16 %v784
        %v857 = vunpack.c.l.b16 %v785
        %v858 = vunpack.c.l.b16 %v786
        %v859 = vunpack.c.h.b16 %v786
        %v860 = vunpack.c.l.b16 %v787
        %v861 = vunpack.c.l.b16 %v788
        %v862 = vunpack.c.h.b16 %v788
        %v863 = vunpack.c.l.b16 %v789
        %v864 = vunpack.c.l.b16 %v790
        %v865 = vunpack.c.h.b16 %v790
        %v866 = vunpack.c.l.b16 %v791
        %v867 = vunpack.c.l.b16 %v792
        %v868 = vunpack.c.h.b16 %v792
        %v869 = vunpack.c.l.b16 %v793
        %v870 = vunpack.c.l.b16 %v794
        %v871 = vunpack.c.h.b16 %v794
        %v872 = vunpack.c.l.b16 %v795
        %v873 = vunpack.c.l.b16 %v796
        %v874 = vunpack.c.h.b16 %v796
        %v875 = vunpack.c.l.b16 %v797
        %v876 = vunpack.c.l.b16 %v798
        %v877 = vunpack.c.h.b16 %v798
        %v878 = vunpack.c.l.b16 %v799
        %v879 = vunpack.c.l.b16 %v800
        %v880 = vunpack.c.h.b16 %v800
        %v881 = vunpack.c.l.b16 %v801
        %v882 = vpack.c.b16 %v837, %v834
        %v883 = vpack.c.b16 %v838, %v835
        %v884 = vpack.c.b16 %v839, %v836
        %v885 = vpack.c.b16 %v843, %v840
        %v886 = vpack.c.b16 %v844, %v841
        %v887 = vpack.c.b16 %v845, %v842
        %v888 = vpack.c.b16 %v849, %v846
        %v889 = vpack.c.b16 %v850, %v847
        %v890 = vpack.c.b16 %v851, %v848
        %v891 = vpack.c.b16 %v855, %v852
        %v892 = vpack.c.b16 %v856, %v853
        %v893 = vpack.c.b16 %v857, %v854
        %v894 = vpack.c.b16 %v861, %v858
        %v895 = vpack.c.b16 %v862, %v859
        %v896 = vpack.c.b16 %v863, %v860
        %v897 = vpack.c.b16 %v867, %v864
        %v898 = vpack.c.b16 %v868, %v865
        %v899 = vpack.c.b16 %v869, %v866
        %v900 = vpack.c.b16 %v873, %v870
        %v901 = vpack.c.b16 %v874, %v871
        %v902 = vpack.c.b16 %v875, %v872
        %v903 = vpack.c.b16 %v879, %v876
        %v904 = vpack.c.b16 %v880, %v877
        %v905 = vpack.c.b16 %v881, %v878
        %930 = vmatprep.subr.bf16.mxu0 %v883
        %931 = vmatpush1.bf16.msra.mxu0 %v882
        %932 = vmatprep.subr.bf16.mxu0 %v886
        %933 = vmatpush1.bf16.msra.mxu0 %v885
        %934 = vmatprep.subr.bf16.mxu0 %v889
        %935 = vmatpush1.bf16.msra.mxu0 %v888
        %936 = vmatprep.subr.bf16.mxu0 %v892
        %937 = vmatpush1.bf16.msra.mxu0 %v891
        %938 = vmatprep.subr.bf16.mxu0 %v895
        %939 = vmatpush1.bf16.msra.mxu0 %v894
        %940 = vmatprep.subr.bf16.mxu0 %v898
        %941 = vmatpush1.bf16.msra.mxu0 %v897
        %942 = vmatprep.subr.bf16.mxu0 %v901
        %943 = vmatpush1.bf16.msra.mxu0 %v900
        %944 = vmatprep.subr.bf16.mxu0 %v904
        %945 = vmatpush1.bf16.msra.mxu0 %v903
        %946 = vmatprep.subr.bf16.mxu0 0
        %947 = vmatpush1.bf16.msra.mxu0 0
        %948 = vmatprep.subr.bf16.mxu0 0
        %949 = vmatpush1.bf16.msra.mxu0 0
        %950 = vmatprep.subr.bf16.mxu0 0
        %951 = vmatpush1.bf16.msra.mxu0 0
        %952 = vmatprep.subr.bf16.mxu0 0
        %953 = vmatpush1.bf16.msra.mxu0 0
        %954 = vmatprep.subr.bf16.mxu0 0
        %955 = vmatpush1.bf16.msra.mxu0 0
        %956 = vmatprep.subr.bf16.mxu0 0
        %957 = vmatpush1.bf16.msra.mxu0 0
        %958 = vmatprep.subr.bf16.mxu0 0
        %959 = vmatpush1.bf16.msra.mxu0 0
        %960 = vmatprep.subr.bf16.mxu0 0
        %961 = vmatpush1.bf16.msra.mxu0 0
        %962 = vmatprep.mubr.bf16.mxu0 0
        %963 = vmatmul.mubr.bf16.gmra.mrb[0].mxu0 %v768
        %v964 = vpop.f32.mrb[0].mxu0
        %v965 = vadd.f32 0.0, %v964
        %v966 = vpop.f32.mrb[0].mxu0
        %v967 = vadd.f32 0.0, %v966
        %v968 = vpop.f32.mrb[0].mxu0
        %v969 = vadd.f32 0.0, %v968
        %v970 = vpop.f32.mrb[0].mxu0
        %v971 = vadd.f32 0.0, %v970
        %972 = vmatprep.mubr.bf16.mxu0 0
        %973 = vmatmul.mubr.bf16.gmra.mrb[0].mxu0 %v769
        %v974 = vpop.f32.mrb[0].mxu0
        %v975 = vadd.f32 0.0, %v974
        %v976 = vpop.f32.mrb[0].mxu0
        %v977 = vadd.f32 0.0, %v976
        %v978 = vpop.f32.mrb[0].mxu0
        %v979 = vpop.f32.mrb[0].mxu0
        %980 = vdwg.mxu0
        %981 = vmatprep.subr.bf16.mxu0 0
        %982 = vmatpush1.bf16.msra.mxu0 %v884
        %983 = vmatprep.subr.bf16.mxu0 0
        %984 = vmatpush1.bf16.msra.mxu0 %v887
        %985 = vmatprep.subr.bf16.mxu0 0
        %986 = vmatpush1.bf16.msra.mxu0 %v890
        %987 = vmatprep.subr.bf16.mxu0 0
        %988 = vmatpush1.bf16.msra.mxu0 %v893
        %989 = vmatprep.subr.bf16.mxu0 0
        %990 = vmatpush1.bf16.msra.mxu0 %v896
        %991 = vmatprep.subr.bf16.mxu0 0
        %992 = vmatpush1.bf16.msra.mxu0 %v899
        %993 = vmatprep.subr.bf16.mxu0 0
        %994 = vmatpush1.bf16.msra.mxu0 %v902
        %995 = vmatprep.subr.bf16.mxu0 0
        %996 = vmatpush1.bf16.msra.mxu0 %v905
        %997 = vmatprep.subr.bf16.mxu0 0
        %998 = vmatpush1.bf16.msra.mxu0 0
        %999 = vmatprep.subr.bf16.mxu0 0
        %1000 = vmatpush1.bf16.msra.mxu0 0
        %1001 = vmatprep.subr.bf16.mxu0 0
        %1002 = vmatpush1.bf16.msra.mxu0 0
        %1003 = vmatprep.subr.bf16.mxu0 0
        %1004 = vmatpush1.bf16.msra.mxu0 0
        %1005 = vmatprep.subr.bf16.mxu0 0
        %1006 = vmatpush1.bf16.msra.mxu0 0
        %1007 = vmatprep.subr.bf16.mxu0 0
        %1008 = vmatpush1.bf16.msra.mxu0 0
        %1009 = vmatprep.subr.bf16.mxu0 0
        %1010 = vmatpush1.bf16.msra.mxu0 0
        %1011 = vmatprep.subr.bf16.mxu0 0
        %1012 = vmatpush1.bf16.msra.mxu0 0
        %1013 = vmatprep.mubr.bf16.mxu0 0
        %1014 = vmatmul.mubr.bf16.gmra.mrb[0].mxu0 %v768
        %v1015 = vpop.f32.mrb[0].mxu0
        %v1016 = vadd.f32 0.0, %v1015
        %v1017 = vpop.f32.mrb[0].mxu0
        %v1018 = vpop.f32.mrb[0].mxu0
        %v1019 = vadd.f32 0.0, %v1018
        %v1020 = vpop.f32.mrb[0].mxu0
        %1021 = vmatprep.mubr.bf16.mxu0 0
        %1022 = vmatmul.mubr.bf16.gmra.mrb[0].mxu0 %v769
        %v1023 = vpop.f32.mrb[0].mxu0
        %v1024 = vadd.f32 0.0, %v1023
        %v1025 = vpop.f32.mrb[0].mxu0
        %v1026 = vpop.f32.mrb[0].mxu0
        %v1027 = vpop.f32.mrb[0].mxu0
        %1028 = vdwg.mxu0
        %v1029 = vlaneseq
        %v1030 = vand.u32 %v1029, 127
        %vm1031 = vcmp.lt.s32.totalorder %v1030, 17
        %v1032 = vpack.c.bf16 %v969, %v965
        %v1033 = vpack.c.bf16 %v975, %v975
        %v1034 = vpack.c.bf16 %v971, %v967
        %v1035 = vpack.c.bf16 %v977, %v977
        %vm1036 = vcmask 261120
        %v1038 = vsel %vm1036, %v1032, 0
        %v1041 = vsel %vm1036, %v1033, 0
        %v1044 = vsel %vm1036, %v1034, 0
        %v1047 = vsel %vm1036, %v1035, 0
        %1049 = vmatprep.subr.bf16.mxu0 0
        %1050 = vmatpush1.bf16.xpose.msra.mxu0 %v1044
        %1051 = vmatprep.subr.bf16.mxu0 0
        %1052 = vmatpush1.bf16.xpose.msra.mxu0 %v1047
        %1053 = vmatprep.subr.bf16.mxu0 0
        %1054 = vmatpush1.bf16.xpose.msra.mxu0 0
        %1055 = vmatprep.subr.bf16.mxu0 0
        %1056 = vmatpush1.bf16.xpose.msra.mxu0 0
        %1057 = vmatprep.subr.bf16.mxu0 0
        %1058 = vmatpush1.bf16.xpose.msra.mxu0 0
        %1059 = vmatprep.subr.bf16.mxu0 0
        %1060 = vmatpush1.bf16.xpose.msra.mxu0 0
        %1061 = vmatprep.subr.bf16.mxu0 0
        %1062 = vmatpush1.bf16.xpose.msra.mxu0 0
        %1063 = vmatprep.subr.bf16.mxu0 0
        %1064 = vmatpush1.bf16.xpose.msra.mxu0 0
        %1065 = vmatprep.subr.bf16.mxu0 0
        %1066 = vmatpush1.bf16.xpose.msra.mxu0 0
        %1067 = vmatprep.subr.bf16.mxu0 0
        %1068 = vmatpush1.bf16.xpose.msra.mxu0 0
        %1069 = vmatprep.subr.bf16.mxu0 0
        %1070 = vmatpush1.bf16.xpose.msra.mxu0 0
        %1071 = vmatprep.subr.bf16.mxu0 0
        %1072 = vmatpush1.bf16.xpose.msra.mxu0 0
        %1073 = vmatprep.subr.bf16.mxu0 0
        %1074 = vmatpush1.bf16.xpose.msra.mxu0 0
        %1075 = vmatprep.subr.bf16.mxu0 0
        %1076 = vmatpush1.bf16.xpose.msra.mxu0 0
        %1077 = vmatprep.subr.bf16.mxu0 0
        %1078 = vmatpush1.bf16.xpose.msra.mxu0 0
        %1079 = vmatprep.subr.bf16.mxu0 0
        %1080 = vmatpush1.bf16.xpose.msra.mxu0 0
        %1081 = vmatprep.mubr.bf16.mxu0 0
        %1082 = vmatmul.mubr.bf16.gmra.mrb[0].mxu0 %v1038
        %v1083 = vpop.f32.mrb[0].mxu0
        %v1084 = vadd.f32 0.0, %v1083
        %v1085 = vpop.f32.mrb[0].mxu0
        %v1086 = vpop.f32.mrb[0].mxu0
        %v1087 = vadd.f32 0.0, %v1086
        %v1088 = vpop.f32.mrb[0].mxu0
        %1089 = vmatprep.mubr.bf16.mxu0 0
        %1090 = vmatmul.mubr.bf16.gmra.mrb[0].mxu0 %v1041
        %v1091 = vpop.f32.mrb[0].mxu0
        %v1092 = vadd.f32 0.0, %v1091
        %v1093 = vpop.f32.mrb[0].mxu0
        %v1094 = vpop.f32.mrb[0].mxu0
        %v1095 = vpop.f32.mrb[0].mxu0
        %1096 = vdwg.mxu0
        %v1097 = vmul.f32 %v1084, 0.17677669
        %v1098 = vmul.f32 %v1087, 0.17677669
        %v1099 = vmul.f32 %v1092, 0.17677669
        %v1100 = vsel %vm1031, %v1097, -1e+30
        %v1101 = vsel %vm1031, %v1098, -1e+30
        %v1102 = vsel %vm1031, %v1099, -1e+30
        %vm1103 = vcmask 195584
        %v1104 = vsel %vm1103, %v1100, -inf
        %1105 = vmax.xlane.f32.xlu0 %v1104
        %v1106 = vpop.xlane.xlu0 %1105
        %v1107 = vsel %vm1103, %v1101, -inf
        %1108 = vmax.xlane.f32.xlu0 %v1107
        %v1109 = vpop.xlane.xlu0 %1108
        %v1110 = vsel %vm1103, %v1102, -inf
        %1111 = vmax.xlane.f32.xlu0 %v1110
        %v1112 = vpop.xlane.xlu0 %1111
        %v1113 = vsub.f32 %v1100, %v1106
        %v1114 = vsub.f32 %v1101, %v1109
        %v1115 = vsub.f32 %v1102, %v1112
        %v1116 = vmul.f32 %v1113, 1.442695
        %v1117 = vpow.pop %v1116
        %v1118 = vmul.f32 %v1114, 1.442695
        %v1119 = vpow.pop %v1118
        %v1120 = vmul.f32 %v1115, 1.442695
        %v1121 = vpow.pop %v1120
        %v1122 = vsel %vm1103, %v1117, 0.0
        %1123 = vadd.xlane.f32.xlu0 %v1122
        %v1124 = vpop.xlane.xlu0 %1123
        %v1125 = vsel %vm1103, %v1119, 0.0
        %1126 = vadd.xlane.f32.xlu0 %v1125
        %v1127 = vpop.xlane.xlu0 %1126
        %v1128 = vsel %vm1103, %v1121, 0.0
        %1129 = vadd.xlane.f32.xlu0 %v1128
        %v1130 = vpop.xlane.xlu0 %1129
        %v1131 = vrcp.pop %v1124
        %v1132 = vrcp.pop %v1127
        %v1133 = vrcp.pop %v1130
        %v1134 = vmul.f32 %v1117, %v1131
        %v1135 = vmul.f32 %v1119, %v1132
        %v1136 = vmul.f32 %v1121, %v1133
        %v1137 = vpack.c.bf16 %v1135, %v1134
        %v1138 = vpack.c.bf16 %v1136, %v1136
        %v1139 = vpack.c.bf16 %v1019, %v1016
        %v1140 = vpack.c.bf16 %v1024, %v1024
        %v1142 = vsel %vm1103, %v1137, 0
        %v1145 = vsel %vm1103, %v1138, 0
        %vm1147 = vcmask 1043456
        %v1149 = vsel %vm1147, %v1140, 0
        %1151 = vmatprep.subr.bf16.mxu0 0
        %1152 = vmatpush1.bf16.msra.mxu0 %v1139
        %1153 = vmatprep.subr.bf16.mxu0 0
        %1154 = vmatpush1.bf16.msra.mxu0 %v1149
        %1155 = vmatprep.subr.bf16.mxu0 0
        %1156 = vmatpush1.bf16.msra.mxu0 0
        %1157 = vmatprep.subr.bf16.mxu0 0
        %1158 = vmatpush1.bf16.msra.mxu0 0
        %1159 = vmatprep.subr.bf16.mxu0 0
        %1160 = vmatpush1.bf16.msra.mxu0 0
        %1161 = vmatprep.subr.bf16.mxu0 0
        %1162 = vmatpush1.bf16.msra.mxu0 0
        %1163 = vmatprep.subr.bf16.mxu0 0
        %1164 = vmatpush1.bf16.msra.mxu0 0
        %1165 = vmatprep.subr.bf16.mxu0 0
        %1166 = vmatpush1.bf16.msra.mxu0 0
        %1167 = vmatprep.subr.bf16.mxu0 0
        %1168 = vmatpush1.bf16.msra.mxu0 0
        %1169 = vmatprep.subr.bf16.mxu0 0
        %1170 = vmatpush1.bf16.msra.mxu0 0
        %1171 = vmatprep.subr.bf16.mxu0 0
        %1172 = vmatpush1.bf16.msra.mxu0 0
        %1173 = vmatprep.subr.bf16.mxu0 0
        %1174 = vmatpush1.bf16.msra.mxu0 0
        %1175 = vmatprep.subr.bf16.mxu0 0
        %1176 = vmatpush1.bf16.msra.mxu0 0
        %1177 = vmatprep.subr.bf16.mxu0 0
        %1178 = vmatpush1.bf16.msra.mxu0 0
        %1179 = vmatprep.subr.bf16.mxu0 0
        %1180 = vmatpush1.bf16.msra.mxu0 0
        %1181 = vmatprep.subr.bf16.mxu0 0
        %1182 = vmatpush1.bf16.msra.mxu0 0
        %1183 = vmatprep.mubr.bf16.mxu0 0
        %1184 = vmatmul.mubr.bf16.gmra.mrb[0].mxu0 %v1142
        %v1185 = vpop.f32.mrb[0].mxu0
        %v1186 = vadd.f32 0.0, %v1185
        %v1187 = vpop.f32.mrb[0].mxu0
        %v1188 = vpop.f32.mrb[0].mxu0
        %v1189 = vadd.f32 0.0, %v1188
        %v1190 = vpop.f32.mrb[0].mxu0
        %1191 = vmatprep.mubr.bf16.mxu0 0
        %1192 = vmatmul.mubr.bf16.gmra.mrb[0].mxu0 %v1145
        %v1193 = vpop.f32.mrb[0].mxu0
        %v1194 = vadd.f32 0.0, %v1193
        %v1195 = vpop.f32.mrb[0].mxu0
        %v1196 = vpop.f32.mrb[0].mxu0
        %v1197 = vpop.f32.mrb[0].mxu0
        %1198 = vdwg.mxu0
        %1201 = vrot.lane.b32.xlu0 %v1032, 96
        %v1202 = vpop.permute.xlu0 %1201
        %1203 = vrot.lane.b32.xlu0 %v1033, 96
        %v1204 = vpop.permute.xlu0 %1203
        %1207 = vrot.lane.b32.xlu0 %v1034, 96
        %v1208 = vpop.permute.xlu0 %1207
        %1209 = vrot.lane.b32.xlu0 %v1035, 96
        %v1210 = vpop.permute.xlu0 %1209
        %v1212 = vsel %vm1036, %v1202, 0
        %v1215 = vsel %vm1036, %v1204, 0
        %v1218 = vsel %vm1036, %v1208, 0
        %v1221 = vsel %vm1036, %v1210, 0
        %1223 = vmatprep.subr.bf16.mxu0 0
        %1224 = vmatpush1.bf16.xpose.msra.mxu0 %v1218
        %1225 = vmatprep.subr.bf16.mxu0 0
        %1226 = vmatpush1.bf16.xpose.msra.mxu0 %v1221
        %1227 = vmatprep.subr.bf16.mxu0 0
        %1228 = vmatpush1.bf16.xpose.msra.mxu0 0
        %1229 = vmatprep.subr.bf16.mxu0 0
        %1230 = vmatpush1.bf16.xpose.msra.mxu0 0
        %1231 = vmatprep.subr.bf16.mxu0 0
        %1232 = vmatpush1.bf16.xpose.msra.mxu0 0
        %1233 = vmatprep.subr.bf16.mxu0 0
        %1234 = vmatpush1.bf16.xpose.msra.mxu0 0
        %1235 = vmatprep.subr.bf16.mxu0 0
        %1236 = vmatpush1.bf16.xpose.msra.mxu0 0
        %1237 = vmatprep.subr.bf16.mxu0 0
        %1238 = vmatpush1.bf16.xpose.msra.mxu0 0
        %1239 = vmatprep.subr.bf16.mxu0 0
        %1240 = vmatpush1.bf16.xpose.msra.mxu0 0
        %1241 = vmatprep.subr.bf16.mxu0 0
        %1242 = vmatpush1.bf16.xpose.msra.mxu0 0
        %1243 = vmatprep.subr.bf16.mxu0 0
        %1244 = vmatpush1.bf16.xpose.msra.mxu0 0
        %1245 = vmatprep.subr.bf16.mxu0 0
        %1246 = vmatpush1.bf16.xpose.msra.mxu0 0
        %1247 = vmatprep.subr.bf16.mxu0 0
        %1248 = vmatpush1.bf16.xpose.msra.mxu0 0
        %1249 = vmatprep.subr.bf16.mxu0 0
        %1250 = vmatpush1.bf16.xpose.msra.mxu0 0
        %1251 = vmatprep.subr.bf16.mxu0 0
        %1252 = vmatpush1.bf16.xpose.msra.mxu0 0
        %1253 = vmatprep.subr.bf16.mxu0 0
        %1254 = vmatpush1.bf16.xpose.msra.mxu0 0
        %1255 = vmatprep.mubr.bf16.mxu0 0
        %1256 = vmatmul.mubr.bf16.gmra.mrb[0].mxu0 %v1212
        %v1257 = vpop.f32.mrb[0].mxu0
        %v1258 = vadd.f32 0.0, %v1257
        %v1259 = vpop.f32.mrb[0].mxu0
        %v1260 = vpop.f32.mrb[0].mxu0
        %v1261 = vadd.f32 0.0, %v1260
        %v1262 = vpop.f32.mrb[0].mxu0
        %1263 = vmatprep.mubr.bf16.mxu0 0
        %1264 = vmatmul.mubr.bf16.gmra.mrb[0].mxu0 %v1215
        %v1265 = vpop.f32.mrb[0].mxu0
        %v1266 = vadd.f32 0.0, %v1265
        %v1267 = vpop.f32.mrb[0].mxu0
        %v1268 = vpop.f32.mrb[0].mxu0
        %v1269 = vpop.f32.mrb[0].mxu0
        %1270 = vdwg.mxu0
        %v1271 = vmul.f32 %v1258, 0.17677669
        %v1272 = vmul.f32 %v1261, 0.17677669
        %v1273 = vmul.f32 %v1266, 0.17677669
        %v1274 = vsel %vm1031, %v1271, -1e+30
        %v1275 = vsel %vm1031, %v1272, -1e+30
        %v1276 = vsel %vm1031, %v1273, -1e+30
        %v1277 = vsel %vm1103, %v1274, -inf
        %1278 = vmax.xlane.f32.xlu0 %v1277
        %v1279 = vpop.xlane.xlu0 %1278
        %v1280 = vsel %vm1103, %v1275, -inf
        %1281 = vmax.xlane.f32.xlu0 %v1280
        %v1282 = vpop.xlane.xlu0 %1281
        %v1283 = vsel %vm1103, %v1276, -inf
        %1284 = vmax.xlane.f32.xlu0 %v1283
        %v1285 = vpop.xlane.xlu0 %1284
        %v1286 = vsub.f32 %v1274, %v1279
        %v1287 = vsub.f32 %v1275, %v1282
        %v1288 = vsub.f32 %v1276, %v1285
        %v1289 = vmul.f32 %v1286, 1.442695
        %v1290 = vpow.pop %v1289
        %v1291 = vmul.f32 %v1287, 1.442695
        %v1292 = vpow.pop %v1291
        %v1293 = vmul.f32 %v1288, 1.442695
        %v1294 = vpow.pop %v1293
        %v1295 = vsel %vm1103, %v1290, 0.0
        %1296 = vadd.xlane.f32.xlu0 %v1295
        %v1297 = vpop.xlane.xlu0 %1296
        %v1298 = vsel %vm1103, %v1292, 0.0
        %1299 = vadd.xlane.f32.xlu0 %v1298
        %v1300 = vpop.xlane.xlu0 %1299
        %v1301 = vsel %vm1103, %v1294, 0.0
        %1302 = vadd.xlane.f32.xlu0 %v1301
        %v1303 = vpop.xlane.xlu0 %1302
        %v1304 = vrcp.pop %v1297
        %v1305 = vrcp.pop %v1300
        %v1306 = vrcp.pop %v1303
        %v1307 = vmul.f32 %v1290, %v1304
        %v1308 = vmul.f32 %v1292, %v1305
        %v1309 = vmul.f32 %v1294, %v1306
        %v1310 = vpack.c.bf16 %v1308, %v1307
        %v1311 = vpack.c.bf16 %v1309, %v1309
        %1314 = vrot.lane.b32.xlu0 %v1139, 96
        %v1315 = vpop.permute.xlu0 %1314
        %1316 = vrot.lane.b32.xlu0 %v1140, 96
        %v1317 = vpop.permute.xlu0 %1316
        %v1320 = vsel %vm1103, %v1310, 0
        %v1323 = vsel %vm1103, %v1311, 0
        %v1326 = vsel %vm1147, %v1317, 0
        %1328 = vmatprep.subr.bf16.mxu0 0
        %1329 = vmatpush1.bf16.msra.mxu0 %v1315
        %1330 = vmatprep.subr.bf16.mxu0 0
        %1331 = vmatpush1.bf16.msra.mxu0 %v1326
        %1332 = vmatprep.subr.bf16.mxu0 0
        %1333 = vmatpush1.bf16.msra.mxu0 0
        %1334 = vmatprep.subr.bf16.mxu0 0
        %1335 = vmatpush1.bf16.msra.mxu0 0
        %1336 = vmatprep.subr.bf16.mxu0 0
        %1337 = vmatpush1.bf16.msra.mxu0 0
        %1338 = vmatprep.subr.bf16.mxu0 0
        %1339 = vmatpush1.bf16.msra.mxu0 0
        %1340 = vmatprep.subr.bf16.mxu0 0
        %1341 = vmatpush1.bf16.msra.mxu0 0
        %1342 = vmatprep.subr.bf16.mxu0 0
        %1343 = vmatpush1.bf16.msra.mxu0 0
        %1344 = vmatprep.subr.bf16.mxu0 0
        %1345 = vmatpush1.bf16.msra.mxu0 0
        %1346 = vmatprep.subr.bf16.mxu0 0
        %1347 = vmatpush1.bf16.msra.mxu0 0
        %1348 = vmatprep.subr.bf16.mxu0 0
        %1349 = vmatpush1.bf16.msra.mxu0 0
        %1350 = vmatprep.subr.bf16.mxu0 0
        %1351 = vmatpush1.bf16.msra.mxu0 0
        %1352 = vmatprep.subr.bf16.mxu0 0
        %1353 = vmatpush1.bf16.msra.mxu0 0
        %1354 = vmatprep.subr.bf16.mxu0 0
        %1355 = vmatpush1.bf16.msra.mxu0 0
        %1356 = vmatprep.subr.bf16.mxu0 0
        %1357 = vmatpush1.bf16.msra.mxu0 0
        %1358 = vmatprep.subr.bf16.mxu0 0
        %1359 = vmatpush1.bf16.msra.mxu0 0
        %1360 = vmatprep.mubr.bf16.mxu0 0
        %1361 = vmatmul.mubr.bf16.gmra.mrb[0].mxu0 %v1320
        %v1362 = vpop.f32.mrb[0].mxu0
        %v1363 = vadd.f32 0.0, %v1362
        %v1364 = vpop.f32.mrb[0].mxu0
        %v1365 = vpop.f32.mrb[0].mxu0
        %v1366 = vadd.f32 0.0, %v1365
        %v1367 = vpop.f32.mrb[0].mxu0
        %1368 = vmatprep.mubr.bf16.mxu0 0
        %1369 = vmatmul.mubr.bf16.gmra.mrb[0].mxu0 %v1323
        %v1370 = vpop.f32.mrb[0].mxu0
        %v1371 = vadd.f32 0.0, %v1370
        %v1372 = vpop.f32.mrb[0].mxu0
        %v1373 = vpop.f32.mrb[0].mxu0
        %v1374 = vpop.f32.mrb[0].mxu0
        %1375 = vdwg.mxu0
        %1376 = vrot.lane.b32.xlu0 %v1032, 64
        %v1377 = vpop.permute.xlu0 %1376
        %1378 = vrot.lane.b32.xlu0 %v1033, 64
        %v1379 = vpop.permute.xlu0 %1378
        %1380 = vrot.lane.b32.xlu0 %v1034, 64
        %v1381 = vpop.permute.xlu0 %1380
        %1382 = vrot.lane.b32.xlu0 %v1035, 64
        %v1383 = vpop.permute.xlu0 %1382
        %v1385 = vsel %vm1036, %v1377, 0
        %v1388 = vsel %vm1036, %v1379, 0
        %v1391 = vsel %vm1036, %v1381, 0
        %v1394 = vsel %vm1036, %v1383, 0
        %1396 = vmatprep.subr.bf16.mxu0 0
        %1397 = vmatpush1.bf16.xpose.msra.mxu0 %v1391
        %1398 = vmatprep.subr.bf16.mxu0 0
        %1399 = vmatpush1.bf16.xpose.msra.mxu0 %v1394
        %1400 = vmatprep.subr.bf16.mxu0 0
        %1401 = vmatpush1.bf16.xpose.msra.mxu0 0
        %1402 = vmatprep.subr.bf16.mxu0 0
        %1403 = vmatpush1.bf16.xpose.msra.mxu0 0
        %1404 = vmatprep.subr.bf16.mxu0 0
        %1405 = vmatpush1.bf16.xpose.msra.mxu0 0
        %1406 = vmatprep.subr.bf16.mxu0 0
        %1407 = vmatpush1.bf16.xpose.msra.mxu0 0
        %1408 = vmatprep.subr.bf16.mxu0 0
        %1409 = vmatpush1.bf16.xpose.msra.mxu0 0
        %1410 = vmatprep.subr.bf16.mxu0 0
        %1411 = vmatpush1.bf16.xpose.msra.mxu0 0
        %1412 = vmatprep.subr.bf16.mxu0 0
        %1413 = vmatpush1.bf16.xpose.msra.mxu0 0
        %1414 = vmatprep.subr.bf16.mxu0 0
        %1415 = vmatpush1.bf16.xpose.msra.mxu0 0
        %1416 = vmatprep.subr.bf16.mxu0 0
        %1417 = vmatpush1.bf16.xpose.msra.mxu0 0
        %1418 = vmatprep.subr.bf16.mxu0 0
        %1419 = vmatpush1.bf16.xpose.msra.mxu0 0
        %1420 = vmatprep.subr.bf16.mxu0 0
        %1421 = vmatpush1.bf16.xpose.msra.mxu0 0
        %1422 = vmatprep.subr.bf16.mxu0 0
        %1423 = vmatpush1.bf16.xpose.msra.mxu0 0
        %1424 = vmatprep.subr.bf16.mxu0 0
        %1425 = vmatpush1.bf16.xpose.msra.mxu0 0
        %1426 = vmatprep.subr.bf16.mxu0 0
        %1427 = vmatpush1.bf16.xpose.msra.mxu0 0
        %1428 = vmatprep.mubr.bf16.mxu0 0
        %1429 = vmatmul.mubr.bf16.gmra.mrb[0].mxu0 %v1385
        %v1430 = vpop.f32.mrb[0].mxu0
        %v1431 = vadd.f32 0.0, %v1430
        %v1432 = vpop.f32.mrb[0].mxu0
        %v1433 = vpop.f32.mrb[0].mxu0
        %v1434 = vadd.f32 0.0, %v1433
        %v1435 = vpop.f32.mrb[0].mxu0
        %1436 = vmatprep.mubr.bf16.mxu0 0
        %1437 = vmatmul.mubr.bf16.gmra.mrb[0].mxu0 %v1388
        %v1438 = vpop.f32.mrb[0].mxu0
        %v1439 = vadd.f32 0.0, %v1438
        %v1440 = vpop.f32.mrb[0].mxu0
        %v1441 = vpop.f32.mrb[0].mxu0
        %v1442 = vpop.f32.mrb[0].mxu0
        %1443 = vdwg.mxu0
        %v1444 = vmul.f32 %v1431, 0.17677669
        %v1445 = vmul.f32 %v1434, 0.17677669
        %v1446 = vmul.f32 %v1439, 0.17677669
        %v1447 = vsel %vm1031, %v1444, -1e+30
        %v1448 = vsel %vm1031, %v1445, -1e+30
        %v1449 = vsel %vm1031, %v1446, -1e+30
        %v1450 = vsel %vm1103, %v1447, -inf
        %1451 = vmax.xlane.f32.xlu0 %v1450
        %v1452 = vpop.xlane.xlu0 %1451
        %v1453 = vsel %vm1103, %v1448, -inf
        %1454 = vmax.xlane.f32.xlu0 %v1453
        %v1455 = vpop.xlane.xlu0 %1454
        %v1456 = vsel %vm1103, %v1449, -inf
        %1457 = vmax.xlane.f32.xlu0 %v1456
        %v1458 = vpop.xlane.xlu0 %1457
        %v1459 = vsub.f32 %v1447, %v1452
        %v1460 = vsub.f32 %v1448, %v1455
        %v1461 = vsub.f32 %v1449, %v1458
        %v1462 = vmul.f32 %v1459, 1.442695
        %v1463 = vpow.pop %v1462
        %v1464 = vmul.f32 %v1460, 1.442695
        %v1465 = vpow.pop %v1464
        %v1466 = vmul.f32 %v1461, 1.442695
        %v1467 = vpow.pop %v1466
        %v1468 = vsel %vm1103, %v1463, 0.0
        %1469 = vadd.xlane.f32.xlu0 %v1468
        %v1470 = vpop.xlane.xlu0 %1469
        %v1471 = vsel %vm1103, %v1465, 0.0
        %1472 = vadd.xlane.f32.xlu0 %v1471
        %v1473 = vpop.xlane.xlu0 %1472
        %v1474 = vsel %vm1103, %v1467, 0.0
        %1475 = vadd.xlane.f32.xlu0 %v1474
        %v1476 = vpop.xlane.xlu0 %1475
        %v1477 = vrcp.pop %v1470
        %v1478 = vrcp.pop %v1473
        %v1479 = vrcp.pop %v1476
        %v1480 = vmul.f32 %v1463, %v1477
        %v1481 = vmul.f32 %v1465, %v1478
        %v1482 = vmul.f32 %v1467, %v1479
        %v1483 = vpack.c.bf16 %v1481, %v1480
        %v1484 = vpack.c.bf16 %v1482, %v1482
        %1485 = vrot.lane.b32.xlu0 %v1139, 64
        %v1486 = vpop.permute.xlu0 %1485
        %1487 = vrot.lane.b32.xlu0 %v1140, 64
        %v1488 = vpop.permute.xlu0 %1487
        %v1491 = vsel %vm1103, %v1483, 0
        %v1494 = vsel %vm1103, %v1484, 0
        %v1497 = vsel %vm1147, %v1488, 0
        %1499 = vmatprep.subr.bf16.mxu0 0
        %1500 = vmatpush1.bf16.msra.mxu0 %v1486
        %1501 = vmatprep.subr.bf16.mxu0 0
        %1502 = vmatpush1.bf16.msra.mxu0 %v1497
        %1503 = vmatprep.subr.bf16.mxu0 0
        %1504 = vmatpush1.bf16.msra.mxu0 0
        %1505 = vmatprep.subr.bf16.mxu0 0
        %1506 = vmatpush1.bf16.msra.mxu0 0
        %1507 = vmatprep.subr.bf16.mxu0 0
        %1508 = vmatpush1.bf16.msra.mxu0 0
        %1509 = vmatprep.subr.bf16.mxu0 0
        %1510 = vmatpush1.bf16.msra.mxu0 0
        %1511 = vmatprep.subr.bf16.mxu0 0
        %1512 = vmatpush1.bf16.msra.mxu0 0
        %1513 = vmatprep.subr.bf16.mxu0 0
        %1514 = vmatpush1.bf16.msra.mxu0 0
        %1515 = vmatprep.subr.bf16.mxu0 0
        %1516 = vmatpush1.bf16.msra.mxu0 0
        %1517 = vmatprep.subr.bf16.mxu0 0
        %1518 = vmatpush1.bf16.msra.mxu0 0
        %1519 = vmatprep.subr.bf16.mxu0 0
        %1520 = vmatpush1.bf16.msra.mxu0 0
        %1521 = vmatprep.subr.bf16.mxu0 0
        %1522 = vmatpush1.bf16.msra.mxu0 0
        %1523 = vmatprep.subr.bf16.mxu0 0
        %1524 = vmatpush1.bf16.msra.mxu0 0
        %1525 = vmatprep.subr.bf16.mxu0 0
        %1526 = vmatpush1.bf16.msra.mxu0 0
        %1527 = vmatprep.subr.bf16.mxu0 0
        %1528 = vmatpush1.bf16.msra.mxu0 0
        %1529 = vmatprep.subr.bf16.mxu0 0
        %1530 = vmatpush1.bf16.msra.mxu0 0
        %1531 = vmatprep.mubr.bf16.mxu0 0
        %1532 = vmatmul.mubr.bf16.gmra.mrb[0].mxu0 %v1491
        %v1533 = vpop.f32.mrb[0].mxu0
        %v1534 = vadd.f32 0.0, %v1533
        %v1535 = vpop.f32.mrb[0].mxu0
        %v1536 = vpop.f32.mrb[0].mxu0
        %v1537 = vadd.f32 0.0, %v1536
        %v1538 = vpop.f32.mrb[0].mxu0
        %1539 = vmatprep.mubr.bf16.mxu0 0
        %1540 = vmatmul.mubr.bf16.gmra.mrb[0].mxu0 %v1494
        %v1541 = vpop.f32.mrb[0].mxu0
        %v1542 = vadd.f32 0.0, %v1541
        %v1543 = vpop.f32.mrb[0].mxu0
        %v1544 = vpop.f32.mrb[0].mxu0
        %v1545 = vpop.f32.mrb[0].mxu0
        %1546 = vdwg.mxu0
        %1547 = vrot.lane.b32.xlu0 %v1032, 32
        %v1548 = vpop.permute.xlu0 %1547
        %1549 = vrot.lane.b32.xlu0 %v1033, 32
        %v1550 = vpop.permute.xlu0 %1549
        %1551 = vrot.lane.b32.xlu0 %v1034, 32
        %v1552 = vpop.permute.xlu0 %1551
        %1553 = vrot.lane.b32.xlu0 %v1035, 32
        %v1554 = vpop.permute.xlu0 %1553
        %v1556 = vsel %vm1036, %v1548, 0
        %v1559 = vsel %vm1036, %v1550, 0
        %v1562 = vsel %vm1036, %v1552, 0
        %v1565 = vsel %vm1036, %v1554, 0
        %1567 = vmatprep.subr.bf16.mxu0 0
        %1568 = vmatpush1.bf16.xpose.msra.mxu0 %v1562
        %1569 = vmatprep.subr.bf16.mxu0 0
        %1570 = vmatpush1.bf16.xpose.msra.mxu0 %v1565
        %1571 = vmatprep.subr.bf16.mxu0 0
        %1572 = vmatpush1.bf16.xpose.msra.mxu0 0
        %1573 = vmatprep.subr.bf16.mxu0 0
        %1574 = vmatpush1.bf16.xpose.msra.mxu0 0
        %1575 = vmatprep.subr.bf16.mxu0 0
        %1576 = vmatpush1.bf16.xpose.msra.mxu0 0
        %1577 = vmatprep.subr.bf16.mxu0 0
        %1578 = vmatpush1.bf16.xpose.msra.mxu0 0
        %1579 = vmatprep.subr.bf16.mxu0 0
        %1580 = vmatpush1.bf16.xpose.msra.mxu0 0
        %1581 = vmatprep.subr.bf16.mxu0 0
        %1582 = vmatpush1.bf16.xpose.msra.mxu0 0
        %1583 = vmatprep.subr.bf16.mxu0 0
        %1584 = vmatpush1.bf16.xpose.msra.mxu0 0
        %1585 = vmatprep.subr.bf16.mxu0 0
        %1586 = vmatpush1.bf16.xpose.msra.mxu0 0
        %1587 = vmatprep.subr.bf16.mxu0 0
        %1588 = vmatpush1.bf16.xpose.msra.mxu0 0
        %1589 = vmatprep.subr.bf16.mxu0 0
        %1590 = vmatpush1.bf16.xpose.msra.mxu0 0
        %1591 = vmatprep.subr.bf16.mxu0 0
        %1592 = vmatpush1.bf16.xpose.msra.mxu0 0
        %1593 = vmatprep.subr.bf16.mxu0 0
        %1594 = vmatpush1.bf16.xpose.msra.mxu0 0
        %1595 = vmatprep.subr.bf16.mxu0 0
        %1596 = vmatpush1.bf16.xpose.msra.mxu0 0
        %1597 = vmatprep.subr.bf16.mxu0 0
        %1598 = vmatpush1.bf16.xpose.msra.mxu0 0
        %1599 = vmatprep.mubr.bf16.mxu0 0
        %1600 = vmatmul.mubr.bf16.gmra.mrb[0].mxu0 %v1556
        %v1601 = vpop.f32.mrb[0].mxu0
        %v1602 = vadd.f32 0.0, %v1601
        %v1603 = vpop.f32.mrb[0].mxu0
        %v1604 = vpop.f32.mrb[0].mxu0
        %v1605 = vadd.f32 0.0, %v1604
        %v1606 = vpop.f32.mrb[0].mxu0
        %1607 = vmatprep.mubr.bf16.mxu0 0
        %1608 = vmatmul.mubr.bf16.gmra.mrb[0].mxu0 %v1559
        %v1609 = vpop.f32.mrb[0].mxu0
        %v1610 = vadd.f32 0.0, %v1609
        %v1611 = vpop.f32.mrb[0].mxu0
        %v1612 = vpop.f32.mrb[0].mxu0
        %v1613 = vpop.f32.mrb[0].mxu0
        %1614 = vdwg.mxu0
        %v1615 = vmul.f32 %v1602, 0.17677669
        %v1616 = vmul.f32 %v1605, 0.17677669
        %v1617 = vmul.f32 %v1610, 0.17677669
        %v1618 = vsel %vm1031, %v1615, -1e+30
        %v1619 = vsel %vm1031, %v1616, -1e+30
        %v1620 = vsel %vm1031, %v1617, -1e+30
        %v1621 = vsel %vm1103, %v1618, -inf
        %1622 = vmax.xlane.f32.xlu0 %v1621
        %v1623 = vpop.xlane.xlu0 %1622
        %v1624 = vsel %vm1103, %v1619, -inf
        %1625 = vmax.xlane.f32.xlu0 %v1624
        %v1626 = vpop.xlane.xlu0 %1625
        %v1627 = vsel %vm1103, %v1620, -inf
        %1628 = vmax.xlane.f32.xlu0 %v1627
        %v1629 = vpop.xlane.xlu0 %1628
        %v1630 = vsub.f32 %v1618, %v1623
        %v1631 = vsub.f32 %v1619, %v1626
        %v1632 = vsub.f32 %v1620, %v1629
        %v1633 = vmul.f32 %v1630, 1.442695
        %v1634 = vpow.pop %v1633
        %v1635 = vmul.f32 %v1631, 1.442695
        %v1636 = vpow.pop %v1635
        %v1637 = vmul.f32 %v1632, 1.442695
        %v1638 = vpow.pop %v1637
        %v1639 = vsel %vm1103, %v1634, 0.0
        %1640 = vadd.xlane.f32.xlu0 %v1639
        %v1641 = vpop.xlane.xlu0 %1640
        %v1642 = vsel %vm1103, %v1636, 0.0
        %1643 = vadd.xlane.f32.xlu0 %v1642
        %v1644 = vpop.xlane.xlu0 %1643
        %v1645 = vsel %vm1103, %v1638, 0.0
        %1646 = vadd.xlane.f32.xlu0 %v1645
        %v1647 = vpop.xlane.xlu0 %1646
        %v1648 = vrcp.pop %v1641
        %v1649 = vrcp.pop %v1644
        %v1650 = vrcp.pop %v1647
        %v1651 = vmul.f32 %v1634, %v1648
        %v1652 = vmul.f32 %v1636, %v1649
        %v1653 = vmul.f32 %v1638, %v1650
        %v1654 = vpack.c.bf16 %v1652, %v1651
        %v1655 = vpack.c.bf16 %v1653, %v1653
        %1656 = vrot.lane.b32.xlu0 %v1139, 32
        %v1657 = vpop.permute.xlu0 %1656
        %1658 = vrot.lane.b32.xlu0 %v1140, 32
        %v1659 = vpop.permute.xlu0 %1658
        %v1662 = vsel %vm1103, %v1654, 0
        %v1665 = vsel %vm1103, %v1655, 0
        %v1668 = vsel %vm1147, %v1659, 0
        %1670 = vmatprep.subr.bf16.mxu0 0
        %1671 = vmatpush1.bf16.msra.mxu0 %v1657
        %1672 = vmatprep.subr.bf16.mxu0 0
        %1673 = vmatpush1.bf16.msra.mxu0 %v1668
        %1674 = vmatprep.subr.bf16.mxu0 0
        %1675 = vmatpush1.bf16.msra.mxu0 0
        %1676 = vmatprep.subr.bf16.mxu0 0
        %1677 = vmatpush1.bf16.msra.mxu0 0
        %1678 = vmatprep.subr.bf16.mxu0 0
        %1679 = vmatpush1.bf16.msra.mxu0 0
        %1680 = vmatprep.subr.bf16.mxu0 0
        %1681 = vmatpush1.bf16.msra.mxu0 0
        %1682 = vmatprep.subr.bf16.mxu0 0
        %1683 = vmatpush1.bf16.msra.mxu0 0
        %1684 = vmatprep.subr.bf16.mxu0 0
        %1685 = vmatpush1.bf16.msra.mxu0 0
        %1686 = vmatprep.subr.bf16.mxu0 0
        %1687 = vmatpush1.bf16.msra.mxu0 0
        %1688 = vmatprep.subr.bf16.mxu0 0
        %1689 = vmatpush1.bf16.msra.mxu0 0
        %1690 = vmatprep.subr.bf16.mxu0 0
        %1691 = vmatpush1.bf16.msra.mxu0 0
        %1692 = vmatprep.subr.bf16.mxu0 0
        %1693 = vmatpush1.bf16.msra.mxu0 0
        %1694 = vmatprep.subr.bf16.mxu0 0
        %1695 = vmatpush1.bf16.msra.mxu0 0
        %1696 = vmatprep.subr.bf16.mxu0 0
        %1697 = vmatpush1.bf16.msra.mxu0 0
        %1698 = vmatprep.subr.bf16.mxu0 0
        %1699 = vmatpush1.bf16.msra.mxu0 0
        %1700 = vmatprep.subr.bf16.mxu0 0
        %1701 = vmatpush1.bf16.msra.mxu0 0
        %1702 = vmatprep.mubr.bf16.mxu0 0
        %1703 = vmatmul.mubr.bf16.gmra.mrb[0].mxu0 %v1662
        %v1704 = vpop.f32.mrb[0].mxu0
        %v1705 = vadd.f32 0.0, %v1704
        %v1706 = vpop.f32.mrb[0].mxu0
        %v1707 = vpop.f32.mrb[0].mxu0
        %v1708 = vadd.f32 0.0, %v1707
        %v1709 = vpop.f32.mrb[0].mxu0
        %1710 = vmatprep.mubr.bf16.mxu0 0
        %1711 = vmatmul.mubr.bf16.gmra.mrb[0].mxu0 %v1665
        %v1712 = vpop.f32.mrb[0].mxu0
        %v1713 = vadd.f32 0.0, %v1712
        %v1714 = vpop.f32.mrb[0].mxu0
        %v1715 = vpop.f32.mrb[0].mxu0
        %v1716 = vpop.f32.mrb[0].mxu0
        %1717 = vdwg.mxu0
        %1721 = vrot.lane.b32.xlu0 %v1363, 32
        %v1722 = vpop.permute.xlu0 %1721
        %1723 = vrot.lane.b32.xlu0 %v1366, 32
        %v1724 = vpop.permute.xlu0 %1723
        %1725 = vrot.lane.b32.xlu0 %v1371, 32
        %v1726 = vpop.permute.xlu0 %1725
        %1733 = vrot.lane.b32.xlu0 %v1534, 64
        %v1734 = vpop.permute.xlu0 %1733
        %1735 = vrot.lane.b32.xlu0 %v1537, 64
        %v1736 = vpop.permute.xlu0 %1735
        %1737 = vrot.lane.b32.xlu0 %v1542, 64
        %v1738 = vpop.permute.xlu0 %1737
        %1745 = vrot.lane.b32.xlu0 %v1705, 96
        %v1746 = vpop.permute.xlu0 %1745
        %1747 = vrot.lane.b32.xlu0 %v1708, 96
        %v1748 = vpop.permute.xlu0 %1747
        %1749 = vrot.lane.b32.xlu0 %v1713, 96
        %v1750 = vpop.permute.xlu0 %1749
        %v1754 = vsel %vm1036, %v1186, %v1722
        %v1755 = vsel %vm1036, %v1189, %v1724
        %v1756 = vsel %vm1036, %v1194, %v1726
        %vm1757 = vcmask 523264
        %v1758 = vsel %vm1757, %v1754, %v1734
        %v1759 = vsel %vm1757, %v1755, %v1736
        %v1760 = vsel %vm1757, %v1756, %v1738
        %vm1761 = vcmask 785408
        %v1762 = vsel %vm1761, %v1758, %v1746
        %v1763 = vsel %vm1761, %v1759, %v1748
        %v1764 = vsel %vm1761, %v1760, %v1750
        %v1765 = vpack.c.bf16 %v1763, %v1762
        %v1766 = vpack.c.bf16 %v1764, %v1764
        %v1767 = vld [vmem:[%s469] sm:$0xf]
        %v1768 = vld [vmem:[%s469 + $0x4] sm:$0xf]
        %v1769 = vld [vmem:[%s469 + $0x8] sm:$0xf]
        %v1770 = vld [vmem:[%s469 + $0xc] sm:$0xf]
        %v1771 = vld [vmem:[%s469 + $0x10] sm:$0xf]
        %v1772 = vld [vmem:[%s469 + $0x14] sm:$0xf]
        %v1773 = vld [vmem:[%s469 + $0x18] sm:$0xf]
        %v1774 = vld [vmem:[%s469 + $0x1c] sm:$0xf]
        %v1775 = vld [vmem:[%s469 + $0x20] sm:$0xf]
        %v1776 = vld [vmem:[%s469 + $0x24] sm:$0xf]
        %v1777 = vld [vmem:[%s469 + $0x28] sm:$0xf]
        %v1778 = vld [vmem:[%s469 + $0x2c] sm:$0xf]
        %v1779 = vld [vmem:[%s469 + $0x30] sm:$0xf]
        %v1780 = vld [vmem:[%s469 + $0x34] sm:$0xf]
        %v1781 = vld [vmem:[%s469 + $0x38] sm:$0xf]
        %v1782 = vld [vmem:[%s469 + $0x3c] sm:$0xf]
        %v1799 = vunpack.c.l.b16 %v1767
        %v1800 = vunpack.c.l.b16 %v1768
        %v1801 = vunpack.c.l.b16 %v1769
        %v1802 = vunpack.c.l.b16 %v1770
        %v1803 = vunpack.c.l.b16 %v1771
        %v1804 = vunpack.c.l.b16 %v1772
        %v1805 = vunpack.c.l.b16 %v1773
        %v1806 = vunpack.c.l.b16 %v1774
        %v1807 = vunpack.c.l.b16 %v1775
        %v1808 = vunpack.c.l.b16 %v1776
        %v1809 = vunpack.c.l.b16 %v1777
        %v1810 = vunpack.c.l.b16 %v1778
        %v1811 = vunpack.c.l.b16 %v1779
        %v1812 = vunpack.c.l.b16 %v1780
        %v1813 = vunpack.c.l.b16 %v1781
        %v1814 = vunpack.c.l.b16 %v1782
        %v1815 = vpack.c.b16 %v1800, %v1799
        %v1816 = vpack.c.b16 %v1802, %v1801
        %v1817 = vpack.c.b16 %v1804, %v1803
        %v1818 = vpack.c.b16 %v1806, %v1805
        %v1819 = vpack.c.b16 %v1808, %v1807
        %v1820 = vpack.c.b16 %v1810, %v1809
        %v1821 = vpack.c.b16 %v1812, %v1811
        %v1822 = vpack.c.b16 %v1814, %v1813
        %1831 = vmatprep.subr.bf16.mxu0 0
        %1832 = vmatpush1.bf16.msra.mxu0 %v1815
        %1833 = vmatprep.subr.bf16.mxu0 0
        %1834 = vmatpush1.bf16.msra.mxu0 %v1816
        %1835 = vmatprep.subr.bf16.mxu0 0
        %1836 = vmatpush1.bf16.msra.mxu0 %v1817
        %1837 = vmatprep.subr.bf16.mxu0 0
        %1838 = vmatpush1.bf16.msra.mxu0 %v1818
        %1839 = vmatprep.subr.bf16.mxu0 0
        %1840 = vmatpush1.bf16.msra.mxu0 %v1819
        %1841 = vmatprep.subr.bf16.mxu0 0
        %1842 = vmatpush1.bf16.msra.mxu0 %v1820
        %1843 = vmatprep.subr.bf16.mxu0 0
        %1844 = vmatpush1.bf16.msra.mxu0 %v1821
        %1845 = vmatprep.subr.bf16.mxu0 0
        %1846 = vmatpush1.bf16.msra.mxu0 %v1822
        %1847 = vmatprep.subr.bf16.mxu0 0
        %1848 = vmatpush1.bf16.msra.mxu0 0
        %1849 = vmatprep.subr.bf16.mxu0 0
        %1850 = vmatpush1.bf16.msra.mxu0 0
        %1851 = vmatprep.subr.bf16.mxu0 0
        %1852 = vmatpush1.bf16.msra.mxu0 0
        %1853 = vmatprep.subr.bf16.mxu0 0
        %1854 = vmatpush1.bf16.msra.mxu0 0
        %1855 = vmatprep.subr.bf16.mxu0 0
        %1856 = vmatpush1.bf16.msra.mxu0 0
        %1857 = vmatprep.subr.bf16.mxu0 0
        %1858 = vmatpush1.bf16.msra.mxu0 0
        %1859 = vmatprep.subr.bf16.mxu0 0
        %1860 = vmatpush1.bf16.msra.mxu0 0
        %1861 = vmatprep.subr.bf16.mxu0 0
        %1862 = vmatpush1.bf16.msra.mxu0 0
        %1863 = vmatprep.mubr.bf16.mxu0 0
        %1864 = vmatmul.mubr.bf16.gmra.mrb[0].mxu0 %v1765
        %v1865 = vpop.f32.mrb[0].mxu0
        %v1866 = vadd.f32 0.0, %v1865
        %v1867 = vpop.f32.mrb[0].mxu0
        %v1868 = vpop.f32.mrb[0].mxu0
        %v1869 = vadd.f32 0.0, %v1868
        %v1870 = vpop.f32.mrb[0].mxu0
        %1871 = vmatprep.mubr.bf16.mxu0 0
        %1872 = vmatmul.mubr.bf16.gmra.mrb[0].mxu0 %v1766
        %v1873 = vpop.f32.mrb[0].mxu0
        %v1874 = vadd.f32 0.0, %v1873
        %v1875 = vpop.f32.mrb[0].mxu0
        %v1876 = vpop.f32.mrb[0].mxu0
        %v1877 = vpop.f32.mrb[0].mxu0
        %1878 = vdwg.mxu0
        %v1879 = vadd.f32 %v716, %v1866
        %v1880 = vadd.f32 %v717, %v1869
        %v1881 = vadd.f32 %v718, %v1874
        %v1882 = vlaneseq
        %v1883 = vshrl.u32 %v1882, 7
        %v1884 = vsub.s32 2, %v1883
        %v1885 = vrot.slane %v719, %v1884
        %v1886 = vadd.f32 %v1879, %v1885
        %v1887 = vadd.f32 %v1880, %v1885
        %v1888 = vadd.f32 %v1881, %v1885
        %1889 = vadd.xlane.f32.xlu0 %v1886
        %v1890 = vpop.xlane.xlu0 %1889
        %1891 = vadd.xlane.f32.xlu0 %v1887
        %v1892 = vpop.xlane.xlu0 %1891
        %1893 = vadd.xlane.f32.xlu0 %v1888
        %v1894 = vpop.xlane.xlu0 %1893
        %v1895 = vmul.f32 %v1890, %v726
        %v1896 = vmul.f32 %v1892, %v726
        %v1897 = vmul.f32 %v1894, %v726
        %v1898 = vsub.f32 %v1886, %v1895
        %v1899 = vsub.f32 %v1887, %v1896
        %v1900 = vsub.f32 %v1888, %v1897
        %v1901 = vmul.f32 %v1898, %v1898
        %v1902 = vmul.f32 %v1899, %v1899
        %v1903 = vmul.f32 %v1900, %v1900
        %1904 = vadd.xlane.f32.xlu0 %v1901
        %v1905 = vpop.xlane.xlu0 %1904
        %1906 = vadd.xlane.f32.xlu0 %v1902
        %v1907 = vpop.xlane.xlu0 %1906
        %1908 = vadd.xlane.f32.xlu0 %v1903
        %v1909 = vpop.xlane.xlu0 %1908
        %v1910 = vmul.f32 %v1905, %v726
        %v1911 = vmul.f32 %v1907, %v726
        %v1912 = vmul.f32 %v1909, %v726
        %v1913 = vadd.f32 %v1910, 1e-05
        %v1914 = vadd.f32 %v1911, 1e-05
        %v1915 = vadd.f32 %v1912, 1e-05
        %v1916 = vrsqrt.pop %v1913
        %v1917 = vrsqrt.pop %v1914
        %v1918 = vrsqrt.pop %v1915
        %v1919 = vmul.f32 %v1898, %v1916
        %v1920 = vmul.f32 %v1899, %v1917
        %v1921 = vmul.f32 %v1900, %v1918
        %v1922 = vlaneseq
        %v1923 = vshrl.u32 %v1922, 7
        %v1924 = vsub.s32 3, %v1923
        %v1925 = vrot.slane %v719, %v1924
        %v1926 = vmul.f32 %v1919, %v1925
        %v1927 = vmul.f32 %v1920, %v1925
        %v1928 = vmul.f32 %v1921, %v1925
        %v1929 = vlaneseq
        %v1930 = vshrl.u32 %v1929, 7
        %v1931 = vsub.s32 4, %v1930
        %v1932 = vrot.slane %v719, %v1931
        %v1933 = vadd.f32 %v1926, %v1932
        %v1934 = vadd.f32 %v1927, %v1932
        %v1935 = vadd.f32 %v1928, %v1932
        %v1936 = vpack.c.bf16 %v1934, %v1933
        %v1937 = vpack.c.bf16 %v1935, %v1935
        %v1938 = vld [vmem:[%s566] sm:$0xff]
        %v1939 = vld [vmem:[%s566 + $0x8] sm:$0xff]
        %v1940 = vld [vmem:[%s566 + $0x10] sm:$0xff]
        %v1941 = vld [vmem:[%s566 + $0x18] sm:$0xff]
        %v1942 = vld [vmem:[%s566 + $0x20] sm:$0xff]
        %v1943 = vld [vmem:[%s566 + $0x28] sm:$0xff]
        %v1944 = vld [vmem:[%s566 + $0x30] sm:$0xff]
        %v1945 = vld [vmem:[%s566 + $0x38] sm:$0xff]
        %v1946 = vld [vmem:[%s566 + $0x40] sm:$0xff]
        %v1947 = vld [vmem:[%s566 + $0x48] sm:$0xff]
        %v1948 = vld [vmem:[%s566 + $0x50] sm:$0xff]
        %v1949 = vld [vmem:[%s566 + $0x58] sm:$0xff]
        %v1950 = vld [vmem:[%s566 + $0x60] sm:$0xff]
        %v1951 = vld [vmem:[%s566 + $0x68] sm:$0xff]
        %v1952 = vld [vmem:[%s566 + $0x70] sm:$0xff]
        %v1953 = vld [vmem:[%s566 + $0x78] sm:$0xff]
        %v1954 = vld [vmem:[%s478] sm:$0x3]
        %v1956 = vlaneseq
        %v1957 = vshrl.u32 %v1956, 7
        %v1958 = vsub.s32 0, %v1957
        %v1959 = vrot.slane %v1954, %v1958
        %v1960 = vlaneseq
        %v1961 = vshrl.u32 %v1960, 7
        %v1962 = vsub.s32 1, %v1961
        %v1963 = vrot.slane %v1954, %v1962
        %v1982 = vunpack.c.l.b16 %v1938
        %v1983 = vunpack.c.h.b16 %v1938
        %v1984 = vunpack.c.l.b16 %v1939
        %v1985 = vunpack.c.h.b16 %v1939
        %v1986 = vunpack.c.l.b16 %v1940
        %v1987 = vunpack.c.h.b16 %v1940
        %v1988 = vunpack.c.l.b16 %v1941
        %v1989 = vunpack.c.h.b16 %v1941
        %v1990 = vunpack.c.l.b16 %v1942
        %v1991 = vunpack.c.h.b16 %v1942
        %v1992 = vunpack.c.l.b16 %v1943
        %v1993 = vunpack.c.h.b16 %v1943
        %v1994 = vunpack.c.l.b16 %v1944
        %v1995 = vunpack.c.h.b16 %v1944
        %v1996 = vunpack.c.l.b16 %v1945
        %v1997 = vunpack.c.h.b16 %v1945
        %v1998 = vunpack.c.l.b16 %v1946
        %v1999 = vunpack.c.h.b16 %v1946
        %v2000 = vunpack.c.l.b16 %v1947
        %v2001 = vunpack.c.h.b16 %v1947
        %v2002 = vunpack.c.l.b16 %v1948
        %v2003 = vunpack.c.h.b16 %v1948
        %v2004 = vunpack.c.l.b16 %v1949
        %v2005 = vunpack.c.h.b16 %v1949
        %v2006 = vunpack.c.l.b16 %v1950
        %v2007 = vunpack.c.h.b16 %v1950
        %v2008 = vunpack.c.l.b16 %v1951
        %v2009 = vunpack.c.h.b16 %v1951
        %v2010 = vunpack.c.l.b16 %v1952
        %v2011 = vunpack.c.h.b16 %v1952
        %v2012 = vunpack.c.l.b16 %v1953
        %v2013 = vunpack.c.h.b16 %v1953
        %v2014 = vpack.c.b16 %v1984, %v1982
        %v2015 = vpack.c.b16 %v1985, %v1983
        %v2016 = vpack.c.b16 %v1988, %v1986
        %v2017 = vpack.c.b16 %v1989, %v1987
        %v2018 = vpack.c.b16 %v1992, %v1990
        %v2019 = vpack.c.b16 %v1993, %v1991
        %v2020 = vpack.c.b16 %v1996, %v1994
        %v2021 = vpack.c.b16 %v1997, %v1995
        %v2022 = vpack.c.b16 %v2000, %v1998
        %v2023 = vpack.c.b16 %v2001, %v1999
        %v2024 = vpack.c.b16 %v2004, %v2002
        %v2025 = vpack.c.b16 %v2005, %v2003
        %v2026 = vpack.c.b16 %v2008, %v2006
        %v2027 = vpack.c.b16 %v2009, %v2007
        %v2028 = vpack.c.b16 %v2012, %v2010
        %v2029 = vpack.c.b16 %v2013, %v2011
        %2046 = vmatprep.subr.bf16.mxu0 %v2015
        %2047 = vmatpush1.bf16.msra.mxu0 %v2014
        %2048 = vmatprep.subr.bf16.mxu0 %v2017
        %2049 = vmatpush1.bf16.msra.mxu0 %v2016
        %2050 = vmatprep.subr.bf16.mxu0 %v2019
        %2051 = vmatpush1.bf16.msra.mxu0 %v2018
        %2052 = vmatprep.subr.bf16.mxu0 %v2021
        %2053 = vmatpush1.bf16.msra.mxu0 %v2020
        %2054 = vmatprep.subr.bf16.mxu0 %v2023
        %2055 = vmatpush1.bf16.msra.mxu0 %v2022
        %2056 = vmatprep.subr.bf16.mxu0 %v2025
        %2057 = vmatpush1.bf16.msra.mxu0 %v2024
        %2058 = vmatprep.subr.bf16.mxu0 %v2027
        %2059 = vmatpush1.bf16.msra.mxu0 %v2026
        %2060 = vmatprep.subr.bf16.mxu0 %v2029
        %2061 = vmatpush1.bf16.msra.mxu0 %v2028
        %2062 = vmatprep.subr.bf16.mxu0 0
        %2063 = vmatpush1.bf16.msra.mxu0 0
        %2064 = vmatprep.subr.bf16.mxu0 0
        %2065 = vmatpush1.bf16.msra.mxu0 0
        %2066 = vmatprep.subr.bf16.mxu0 0
        %2067 = vmatpush1.bf16.msra.mxu0 0
        %2068 = vmatprep.subr.bf16.mxu0 0
        %2069 = vmatpush1.bf16.msra.mxu0 0
        %2070 = vmatprep.subr.bf16.mxu0 0
        %2071 = vmatpush1.bf16.msra.mxu0 0
        %2072 = vmatprep.subr.bf16.mxu0 0
        %2073 = vmatpush1.bf16.msra.mxu0 0
        %2074 = vmatprep.subr.bf16.mxu0 0
        %2075 = vmatpush1.bf16.msra.mxu0 0
        %2076 = vmatprep.subr.bf16.mxu0 0
        %2077 = vmatpush1.bf16.msra.mxu0 0
        %2078 = vmatprep.mubr.bf16.mxu0 0
        %2079 = vmatmul.mubr.bf16.gmra.mrb[0].mxu0 %v1936
        %v2080 = vpop.f32.mrb[0].mxu0
        %v2081 = vadd.f32 %v1959, %v2080
        %v2082 = vpop.f32.mrb[0].mxu0
        %v2083 = vadd.f32 %v1963, %v2082
        %v2084 = vpop.f32.mrb[0].mxu0
        %v2085 = vadd.f32 %v1959, %v2084
        %v2086 = vpop.f32.mrb[0].mxu0
        %v2087 = vadd.f32 %v1963, %v2086
        %2088 = vmatprep.mubr.bf16.mxu0 0
        %2089 = vmatmul.mubr.bf16.gmra.mrb[0].mxu0 %v1937
        %v2090 = vpop.f32.mrb[0].mxu0
        %v2091 = vadd.f32 %v1959, %v2090
        %v2092 = vpop.f32.mrb[0].mxu0
        %v2093 = vadd.f32 %v1963, %v2092
        %v2094 = vpop.f32.mrb[0].mxu0
        %v2095 = vpop.f32.mrb[0].mxu0
        %2096 = vdwg.mxu0
        %v2097 = vmul.f32 %v2081, 0.5
        %v2098 = vmul.f32 %v2083, 0.5
        %v2099 = vmul.f32 %v2085, 0.5
        %v2100 = vmul.f32 %v2087, 0.5
        %v2101 = vmul.f32 %v2091, 0.5
        %v2102 = vmul.f32 %v2093, 0.5
        %v2103 = vmul.f32 %v2081, 0.044715
        %v2104 = vmul.f32 %v2083, 0.044715
        %v2105 = vmul.f32 %v2085, 0.044715
        %v2106 = vmul.f32 %v2087, 0.044715
        %v2107 = vmul.f32 %v2091, 0.044715
        %v2108 = vmul.f32 %v2093, 0.044715
        %v2109 = vmul.f32 %v2103, %v2081
        %v2110 = vmul.f32 %v2104, %v2083
        %v2111 = vmul.f32 %v2105, %v2085
        %v2112 = vmul.f32 %v2106, %v2087
        %v2113 = vmul.f32 %v2107, %v2091
        %v2114 = vmul.f32 %v2108, %v2093
        %v2115 = vmul.f32 %v2109, %v2081
        %v2116 = vmul.f32 %v2110, %v2083
        %v2117 = vmul.f32 %v2111, %v2085
        %v2118 = vmul.f32 %v2112, %v2087
        %v2119 = vmul.f32 %v2113, %v2091
        %v2120 = vmul.f32 %v2114, %v2093
        %v2121 = vadd.f32 %v2081, %v2115
        %v2122 = vadd.f32 %v2083, %v2116
        %v2123 = vadd.f32 %v2085, %v2117
        %v2124 = vadd.f32 %v2087, %v2118
        %v2125 = vadd.f32 %v2091, %v2119
        %v2126 = vadd.f32 %v2093, %v2120
        %v2127 = vmul.f32 %v2121, 0.7978846
        %v2128 = vmul.f32 %v2122, 0.7978846
        %v2129 = vmul.f32 %v2123, 0.7978846
        %v2130 = vmul.f32 %v2124, 0.7978846
        %v2131 = vmul.f32 %v2125, 0.7978846
        %v2132 = vmul.f32 %v2126, 0.7978846
        %v2133 = vtanh.pop %v2127
        %v2134 = vtanh.pop %v2128
        %v2135 = vtanh.pop %v2129
        %v2136 = vtanh.pop %v2130
        %v2137 = vtanh.pop %v2131
        %v2138 = vtanh.pop %v2132
        %v2139 = vadd.f32 %v2133, 1.0
        %v2140 = vadd.f32 %v2134, 1.0
        %v2141 = vadd.f32 %v2135, 1.0
        %v2142 = vadd.f32 %v2136, 1.0
        %v2143 = vadd.f32 %v2137, 1.0
        %v2144 = vadd.f32 %v2138, 1.0
        %v2145 = vmul.f32 %v2097, %v2139
        %v2146 = vmul.f32 %v2098, %v2140
        %v2147 = vmul.f32 %v2099, %v2141
        %v2148 = vmul.f32 %v2100, %v2142
        %v2149 = vmul.f32 %v2101, %v2143
        %v2150 = vmul.f32 %v2102, %v2144
        %v2151 = vpack.c.bf16 %v2147, %v2145
        %v2152 = vpack.c.bf16 %v2148, %v2146
        %v2153 = vpack.c.bf16 %v2149, %v2149
        %v2154 = vpack.c.bf16 %v2150, %v2150
        %v2155 = vld [vmem:[%s487] sm:$0xf]
        %v2156 = vld [vmem:[%s487 + $0x4] sm:$0xf]
        %v2157 = vld [vmem:[%s487 + $0x8] sm:$0xf]
        %v2158 = vld [vmem:[%s487 + $0xc] sm:$0xf]
        %v2159 = vld [vmem:[%s487 + $0x10] sm:$0xf]
        %v2160 = vld [vmem:[%s487 + $0x14] sm:$0xf]
        %v2161 = vld [vmem:[%s487 + $0x18] sm:$0xf]
        %v2162 = vld [vmem:[%s487 + $0x1c] sm:$0xf]
        %v2163 = vld [vmem:[%s487 + $0x20] sm:$0xf]
        %v2164 = vld [vmem:[%s487 + $0x24] sm:$0xf]
        %v2165 = vld [vmem:[%s487 + $0x28] sm:$0xf]
        %v2166 = vld [vmem:[%s487 + $0x2c] sm:$0xf]
        %v2167 = vld [vmem:[%s487 + $0x30] sm:$0xf]
        %v2168 = vld [vmem:[%s487 + $0x34] sm:$0xf]
        %v2169 = vld [vmem:[%s487 + $0x38] sm:$0xf]
        %v2170 = vld [vmem:[%s487 + $0x3c] sm:$0xf]
        %v2171 = vld [vmem:[%s487 + $0x40] sm:$0xf]
        %v2172 = vld [vmem:[%s487 + $0x44] sm:$0xf]
        %v2173 = vld [vmem:[%s487 + $0x48] sm:$0xf]
        %v2174 = vld [vmem:[%s487 + $0x4c] sm:$0xf]
        %v2175 = vld [vmem:[%s487 + $0x50] sm:$0xf]
        %v2176 = vld [vmem:[%s487 + $0x54] sm:$0xf]
        %v2177 = vld [vmem:[%s487 + $0x58] sm:$0xf]
        %v2178 = vld [vmem:[%s487 + $0x5c] sm:$0xf]
        %v2179 = vld [vmem:[%s487 + $0x60] sm:$0xf]
        %v2180 = vld [vmem:[%s487 + $0x64] sm:$0xf]
        %v2181 = vld [vmem:[%s487 + $0x68] sm:$0xf]
        %v2182 = vld [vmem:[%s487 + $0x6c] sm:$0xf]
        %v2183 = vld [vmem:[%s487 + $0x70] sm:$0xf]
        %v2184 = vld [vmem:[%s487 + $0x74] sm:$0xf]
        %v2185 = vld [vmem:[%s487 + $0x78] sm:$0xf]
        %v2186 = vld [vmem:[%s487 + $0x7c] sm:$0xf]
        %v2219 = vunpack.c.l.b16 %v2155
        %v2220 = vunpack.c.l.b16 %v2156
        %v2221 = vunpack.c.l.b16 %v2157
        %v2222 = vunpack.c.l.b16 %v2158
        %v2223 = vunpack.c.l.b16 %v2159
        %v2224 = vunpack.c.l.b16 %v2160
        %v2225 = vunpack.c.l.b16 %v2161
        %v2226 = vunpack.c.l.b16 %v2162
        %v2227 = vunpack.c.l.b16 %v2163
        %v2228 = vunpack.c.l.b16 %v2164
        %v2229 = vunpack.c.l.b16 %v2165
        %v2230 = vunpack.c.l.b16 %v2166
        %v2231 = vunpack.c.l.b16 %v2167
        %v2232 = vunpack.c.l.b16 %v2168
        %v2233 = vunpack.c.l.b16 %v2169
        %v2234 = vunpack.c.l.b16 %v2170
        %v2235 = vunpack.c.l.b16 %v2171
        %v2236 = vunpack.c.l.b16 %v2172
        %v2237 = vunpack.c.l.b16 %v2173
        %v2238 = vunpack.c.l.b16 %v2174
        %v2239 = vunpack.c.l.b16 %v2175
        %v2240 = vunpack.c.l.b16 %v2176
        %v2241 = vunpack.c.l.b16 %v2177
        %v2242 = vunpack.c.l.b16 %v2178
        %v2243 = vunpack.c.l.b16 %v2179
        %v2244 = vunpack.c.l.b16 %v2180
        %v2245 = vunpack.c.l.b16 %v2181
        %v2246 = vunpack.c.l.b16 %v2182
        %v2247 = vunpack.c.l.b16 %v2183
        %v2248 = vunpack.c.l.b16 %v2184
        %v2249 = vunpack.c.l.b16 %v2185
        %v2250 = vunpack.c.l.b16 %v2186
        %v2251 = vpack.c.b16 %v2220, %v2219
        %v2252 = vpack.c.b16 %v2222, %v2221
        %v2253 = vpack.c.b16 %v2224, %v2223
        %v2254 = vpack.c.b16 %v2226, %v2225
        %v2255 = vpack.c.b16 %v2228, %v2227
        %v2256 = vpack.c.b16 %v2230, %v2229
        %v2257 = vpack.c.b16 %v2232, %v2231
        %v2258 = vpack.c.b16 %v2234, %v2233
        %v2259 = vpack.c.b16 %v2236, %v2235
        %v2260 = vpack.c.b16 %v2238, %v2237
        %v2261 = vpack.c.b16 %v2240, %v2239
        %v2262 = vpack.c.b16 %v2242, %v2241
        %v2263 = vpack.c.b16 %v2244, %v2243
        %v2264 = vpack.c.b16 %v2246, %v2245
        %v2265 = vpack.c.b16 %v2248, %v2247
        %v2266 = vpack.c.b16 %v2250, %v2249
        %2283 = vmatprep.subr.bf16.mxu0 0
        %2284 = vmatpush1.bf16.msra.mxu0 %v2251
        %2285 = vmatprep.subr.bf16.mxu0 0
        %2286 = vmatpush1.bf16.msra.mxu0 %v2252
        %2287 = vmatprep.subr.bf16.mxu0 0
        %2288 = vmatpush1.bf16.msra.mxu0 %v2253
        %2289 = vmatprep.subr.bf16.mxu0 0
        %2290 = vmatpush1.bf16.msra.mxu0 %v2254
        %2291 = vmatprep.subr.bf16.mxu0 0
        %2292 = vmatpush1.bf16.msra.mxu0 %v2255
        %2293 = vmatprep.subr.bf16.mxu0 0
        %2294 = vmatpush1.bf16.msra.mxu0 %v2256
        %2295 = vmatprep.subr.bf16.mxu0 0
        %2296 = vmatpush1.bf16.msra.mxu0 %v2257
        %2297 = vmatprep.subr.bf16.mxu0 0
        %2298 = vmatpush1.bf16.msra.mxu0 %v2258
        %2299 = vmatprep.subr.bf16.mxu0 0
        %2300 = vmatpush1.bf16.msra.mxu0 %v2259
        %2301 = vmatprep.subr.bf16.mxu0 0
        %2302 = vmatpush1.bf16.msra.mxu0 %v2260
        %2303 = vmatprep.subr.bf16.mxu0 0
        %2304 = vmatpush1.bf16.msra.mxu0 %v2261
        %2305 = vmatprep.subr.bf16.mxu0 0
        %2306 = vmatpush1.bf16.msra.mxu0 %v2262
        %2307 = vmatprep.subr.bf16.mxu0 0
        %2308 = vmatpush1.bf16.msra.mxu0 %v2263
        %2309 = vmatprep.subr.bf16.mxu0 0
        %2310 = vmatpush1.bf16.msra.mxu0 %v2264
        %2311 = vmatprep.subr.bf16.mxu0 0
        %2312 = vmatpush1.bf16.msra.mxu0 %v2265
        %2313 = vmatprep.subr.bf16.mxu0 0
        %2314 = vmatpush1.bf16.msra.mxu0 %v2266
        %2315 = vmatprep.mubr.bf16.mxu0 %v2152
        %2316 = vmatmul.mubr.bf16.gmra.mrb[0].mxu0 %v2151
        %v2317 = vpop.f32.mrb[0].mxu0
        %v2318 = vadd.f32 0.0, %v2317
        %v2319 = vpop.f32.mrb[0].mxu0
        %v2320 = vpop.f32.mrb[0].mxu0
        %v2321 = vadd.f32 0.0, %v2320
        %v2322 = vpop.f32.mrb[0].mxu0
        %2323 = vmatprep.mubr.bf16.mxu0 %v2154
        %2324 = vmatmul.mubr.bf16.gmra.mrb[0].mxu0 %v2153
        %v2325 = vpop.f32.mrb[0].mxu0
        %v2326 = vadd.f32 0.0, %v2325
        %v2327 = vpop.f32.mrb[0].mxu0
        %v2328 = vpop.f32.mrb[0].mxu0
        %v2329 = vpop.f32.mrb[0].mxu0
        %2330 = vdwg.mxu0
        %v2331 = vadd.f32 %v1886, %v2318
        %v2332 = vadd.f32 %v1887, %v2321
        %v2333 = vadd.f32 %v1888, %v2326
        %v2334 = vlaneseq
        %v2335 = vshrl.u32 %v2334, 7
        %v2336 = vsub.s32 5, %v2335
        %v2337 = vrot.slane %v719, %v2336
        %v2338 = vadd.f32 %v2331, %v2337
        %v2339 = vadd.f32 %v2332, %v2337
        %v2340 = vadd.f32 %v2333, %v2337
        %2341 = vst [vmem:[%s715] sm:$0xff] %v2338
        %2342 = vst [vmem:[%s715 + $0x8] sm:$0xff] %v2339
        %2343 = vst [vmem:[%s715 + $0x10] sm:$0xff] %v2340
        %p2344 = scmp.eq.s32.totalorder %s32, 1
        // Predicated region
        $region85: #{vit_forward.1} parent=59 // pred_check
          %p2345 = pneg %p2344
        $region86: #{vit_forward.1} parent=59 // pred_check_branch
          %2347 = sbr.rel (%p2345) target = $region88
        $region87: #{vit_forward.1} parent=59 // pred_region
          %v2348 = vld [vmem:[#allocation3 + $0x2] sm:$0x1]
          %v2349 = vld [vmem:[#allocation3 + $0x3] sm:$0x1]
          %vm2350 = vcmask 1040384
          %v2351 = vsel %vm2350, %v2338, 0.0
          %2352 = vadd.xlane.f32.xlu0 %v2351
          %v2353 = vpop.xlane.xlu0 %2352
          %v2354 = vmul.f32 %v2353, %v726
          %v2355 = vsub.f32 %v2338, %v2354
          %v2356 = vmul.f32 %v2355, %v2355
          %v2357 = vsel %vm2350, %v2356, 0.0
          %2358 = vadd.xlane.f32.xlu0 %v2357
          %v2359 = vpop.xlane.xlu0 %2358
          %v2360 = vmul.f32 %v2359, %v726
          %v2361 = vadd.f32 %v2360, 1e-05
          %v2362 = vrsqrt.pop %v2361
          %v2363 = vmul.f32 %v2355, %v2362
          %v2364 = vmul.f32 %v2363, %v2348
          %v2365 = vadd.f32 %v2364, %v2349
          %v2366 = vld [vmem:[#allocation3 + $0x4] sm:$0x1]
          %v2367 = vmul.f32 %v2365, %v2366
          %v2368 = vsel %vm2350, %v2367, 0.0
          %2369 = vadd.xlane.f32.xlu0 %v2368
          %v2370 = vpop.xlane.xlu0 %2369
          %v2371 = vld [vmem:[#allocation3 + $0x5] sm:$0x1]
          %v2372 = vadd.f32 %v2370, %v2371
          %v2373 = vtanh.pop %v2372
          %v2374 = vxor.u32 %v2373, 2147483648
          %v2375 = vmul.f32 %v2374, 1.442695
          %v2376 = vpow.pop %v2375
          %v2377 = vadd.f32 %v2376, 1.0
          %v2378 = vrcp.pop %v2377
          %v2379 = vmul.f32 1.0, %v2378
          %2380 = vst [vmem:[%s569] sm:$0x1] %v2379
        $region88: #{vit_forward.1} parent=59 // pred_fallthru
          _
        %p2381 = scmp.lt.s32.totalorder %s33, 1
        %s2382 = scalar_select %p2381, %s33, 1
        %s2383 = scalar_lea.vmem %s10, %s2382
        // Predicated region
        $region89: #{vit_forward.1} parent=59 // pred_check
          %p2384 = pneg %p303
        $region90: #{vit_forward.1} parent=59 // pred_check_branch
          %2386 = sbr.rel (%p2384) target = $region92
        $region91: #{vit_forward.1} parent=59 // pred_region
          _
        $region92: #{vit_forward.1} parent=59 // pred_fallthru
          _
      $region60: #{vit_forward.1} parent=5 // pred_fallthru
        _
      %p2387 = scmp.le.s32.totalorder 2, %s23
      // Predicated region
      $region93: #{vit_forward.1} parent=5 // pred_check
        %p2388 = pneg %p2387
      $region94: #{vit_forward.1} parent=5 // pred_check_branch
        %2390 = sbr.rel (%p2388) target = $region96
      $region95: #{vit_forward.1} parent=5 // pred_region
        %s2391 = ssub.s32 %s23, 2
        // Predicated region
        $region97: #{vit_forward.1} parent=95 // pred_check
          %p2392 = pneg %p309
        $region98: #{vit_forward.1} parent=95 // pred_check_branch
          %2394 = sbr.rel (%p2392) target = $region100
        $region99: #{vit_forward.1} parent=95 // pred_region
          %p2395 = scmp.lt.s32.totalorder %s35, 1
          %s2396 = scalar_select %p2395, %s35, 1
          %s2397 = scalar_lea.vmem %s10, %s2396
        $region100: #{vit_forward.1} parent=95 // pred_fallthru
          _
      $region96: #{vit_forward.1} parent=5 // pred_fallthru
        _
    $region6: #{vit_forward.1} parent=1 // loop_footer
      %s27 = sadd.s32 1, %s23
    $region7: #{vit_forward.1} parent=1 // loop_footer_branch
      %22 = sbr.rel target = $region3
    $region8: #{vit_forward.1} parent=1 // loop_exit
      _
    %2398 = vsyncpa [#allocation4], 1
    %s2399 = scalar_lea.sflag [#allocation4], 1
    %2400 = vsyncpa %s2399, 1
    %2401 = vsyncpa [#allocation6], 1
    %s2402 = scalar_lea.sflag [#allocation6], 1
    %2403 = vsyncpa %s2402, 1
    %2404 = vsyncpa [#allocation9], 1
    %s2405 = scalar_lea.sflag [#allocation9], 1
    %2406 = vsyncpa %s2405, 1

</llo_original>
